<compile_context>
chip_gen: v7x
topology: tpu7x:2x2x1
jax: 0.10.0
libtpu: 0.0.40
codegen_flags: <defaults>
</compile_context>

<pallas_src>
import functools

import jax
import jax.numpy as jnp
import numpy as np
from jax.experimental import pallas as pl
from jax.experimental.pallas import tpu as pltpu


# --------------------------------------------------------------------------- #
# Kernel
# --------------------------------------------------------------------------- #
def _attn_kernel(x_ref, wqkv_ref, wp_ref, bp_ref, o_ref, acc_ref, *,
                 bt: int, n: int, head_dim: int):
    """Grid = (batch_tile, head).  One head of one (bt, n, C) tile per step.

    x_ref    : (bt*n, C)   flat activation tile (resident across the head axis)
    wqkv_ref : (1, C, 3*hd) fused per-head q|k|v weight, scale folded into q
    wp_ref   : (1, hd, C)  per-head slice of the output projection
    bp_ref   : (1, C)      output projection bias
    o_ref    : (bt*n, C)   output tile (written at the last head only)
    acc_ref  : (bt*n, C)   f32 VMEM accumulator for sum_h y_h @ Wp[h]
    """
    h = pl.program_id(1)
    hd = head_dim
    dt = x_ref.dtype

    @pl.when(h == 0)
    def _init():
        acc_ref[...] = jnp.zeros_like(acc_ref)

    x2d = x_ref[...]                                        # (T, C), T = bt*n
    w_qkv = wqkv_ref[0]                                     # (C, 3*hd), free major index

    # Fused q|k|v projection for this head: one MXU contraction, lane width 3*hd.
    # Emits the activation dtype directly (no separate cast pass).
    qkv = jnp.dot(x2d, w_qkv, preferred_element_type=dt)    # (T, 3*hd)
    qkv3 = qkv.reshape(bt, n, 3 * hd)                       # head-local, hd-wide reshape
    q = qkv3[..., 0 * hd:1 * hd]                            # scale pre-folded into Wq
    k = qkv3[..., 1 * hd:2 * hd]
    v = qkv3[..., 2 * hd:3 * hd]

    # Batched attention over the bt tile (symmetric leading-batch 3-D einsums).
    s = jnp.einsum("bnd,bmd->bnm", q, k,
                   preferred_element_type=jnp.float32)      # (bt, n, n) f32
    s = s - jnp.max(s, axis=-1, keepdims=True)
    p = jnp.exp(s)                                          # un-normalised probs
    l = jnp.sum(p, axis=-1, keepdims=True)                  # (bt, n, 1) row sums
    # attn_drop is nn.Dropout(0.0) -> identity at inference.
    y = jnp.einsum("bnm,bmd->bnd", p.astype(dt), v,
                   preferred_element_type=jnp.float32)      # (bt, n, hd) f32
    # Deferred softmax normalisation: scale the small PV result, not the probs.
    y = y * pl.reciprocal(l, approx=True)

    # proj(concat_h y_h) == sum_h y_h @ Wp[h] — accumulate this head's slice.
    acc_ref[...] += jnp.dot(y.reshape(bt * n, hd).astype(dt), wp_ref[0],
                            preferred_element_type=jnp.float32)

    @pl.when(h == pl.num_programs(1) - 1)
    def _finalize():
        # proj_drop(0.0) -> identity.
        o_ref[...] = (acc_ref[...] + bp_ref[...]).astype(o_ref.dtype)


# --------------------------------------------------------------------------- #
# Sizing helpers (generation-aware, best effort)
# --------------------------------------------------------------------------- #
def _num_tensorcores():
    """Best-effort TensorCore count per chip (only used for grid sizing)."""
    try:
        info = pltpu.get_tpu_info()
        for attr in ("num_cores", "core_count", "num_tensorcores"):
            val = getattr(info, attr, None)
            if val:
                return max(1, int(val))
    except Exception:
        pass
    try:
        kind = jax.devices()[0].device_kind.lower()
        if any(tag in kind for tag in ("v4", "v5p", "7")):   # megacore / dual-TC parts
            return 2
    except Exception:
        pass
    return 1


def _vmem_limit_bytes():
    """Raise the scoped VMEM limit, staying well under physical capacity."""
    cap = None
    try:
        cap = getattr(pltpu.get_tpu_info(), "vmem_capacity_bytes", None)
    except Exception:
        cap = None
    if not cap:
        cap = 64 * 1024 * 1024        # conservative (v7x per-core physical VMEM)
    return int(min(int(0.75 * cap), 100 * 1024 * 1024))


def _pick_bt(B, N, *, num_cores, target_rows=1024, score_budget_bytes=8 << 20):
    """Batch elements per grid step.

    Targets ~1024 projection rows per step (amortise ~0.35us/step overhead),
    caps the per-head (bt, N, N) f32 score tensor, and only forces >= num_cores
    batch steps on multi-TensorCore parts (single-TC chips get the full tile).
    """
    if B <= 1:
        return 1
    cap = max(1, min(B, target_rows // max(N, 1)))
    cap = min(cap, max(1, score_budget_bytes // max(4 * N * N, 1)))
    if num_cores > 1:
        cap = min(cap, max(1, B // num_cores))
    for bt in range(cap, 0, -1):
        if B % bt == 0 and (bt * N) % 8 == 0:     # keep sublane-aligned row blocks
            return bt
    return B                                      # full-array block is always legal


# --------------------------------------------------------------------------- #
# Wrapper
# --------------------------------------------------------------------------- #
def global_sparse_attn(x, H, W, params, *, num_heads, sr=1, qk_scale=None):
    """JAX wrapper reproducing GlobalSparseAttn.forward.

    params["wqkv"] : (C, 3C)  == torch qkv.weight.T, columns [q | k | v]
    params["wproj"]: (C, C)   == torch proj.weight.T
    params["bproj"]: (C,)
    """
    B, N, C = x.shape
    if sr > 1:
        # AvgPool2d(kernel_size=1, stride=sr) on the (B, C, H, W) view is plain
        # strided spatial subsampling — done in JAX outside the kernel.
        xi = jnp.transpose(x, (0, 2, 1)).reshape(B, C, H, W)
        xi = xi[:, :, ::sr, ::sr]
        x = jnp.transpose(xi.reshape(B, C, -1), (0, 2, 1))
        N = x.shape[1]

    head_dim = C // num_heads
    scale = qk_scale if qk_scale is not None else head_dim ** (-0.5)
    dt = x.dtype

    wqkv = params["wqkv"]
    wproj = params["wproj"]
    bproj = params["bproj"].reshape(1, C).astype(jnp.float32)

    # Per-head fused q|k|v weight: (num_heads, C, 3*head_dim), scale folded into q.
    wq = wqkv[:, 0 * C:1 * C].reshape(C, num_heads, head_dim) * scale
    wk = wqkv[:, 1 * C:2 * C].reshape(C, num_heads, head_dim)
    wv = wqkv[:, 2 * C:3 * C].reshape(C, num_heads, head_dim)
    wqkv_h = jnp.transpose(jnp.concatenate([wq, wk, wv], axis=-1), (1, 0, 2)).astype(dt)
    # Output projection split by head: row h*hd+d of wproj -> head h, dim d.
    wp_h = wproj.reshape(num_heads, head_dim, C).astype(dt)

    num_cores = _num_tensorcores()
    Bt = _pick_bt(B, N, num_cores=num_cores)
    grid = (B // Bt, num_heads)
    T = Bt * N

    # Flat (B*N, C) activations: leading-dim reshape outside the kernel, so the
    # kernel itself never reshapes/relayouts the (·, C)-sized tensors.
    x_flat = x.reshape(B * N, C)

    kernel = functools.partial(_attn_kernel, bt=Bt, n=N, head_dim=head_dim)

    flops = (2 * B * N * C * (3 * C)                      # qkv projections
             + 4 * B * num_heads * N * N * head_dim       # QK^T + PV
             + 2 * B * N * C * C)                         # output projection
    param_bytes = sum(int(a.size) * a.dtype.itemsize for a in (wqkv_h, wp_h, bproj))
    io_bytes = 2 * int(x_flat.size) * x_flat.dtype.itemsize
    cost = pl.CostEstimate(flops=int(flops),
                           transcendentals=int(B * num_heads * N * N),
                           bytes_accessed=int(io_bytes + param_bytes))

    out_flat = pl.pallas_call(
        kernel,
        out_shape=jax.ShapeDtypeStruct((B * N, C), x.dtype),
        grid_spec=pltpu.PrefetchScalarGridSpec(
            num_scalar_prefetch=0,
            grid=grid,
            in_specs=[
                pl.BlockSpec((T, C), lambda b, h: (b, 0)),                  # x tile (resident over h)
                pl.BlockSpec((1, C, 3 * head_dim), lambda b, h: (h, 0, 0)),  # fused qkv weight, head h
                pl.BlockSpec((1, head_dim, C), lambda b, h: (h, 0, 0)),      # proj weight slice, head h
                pl.BlockSpec((1, C), lambda b, h: (0, 0)),                   # proj bias
            ],
            out_specs=pl.BlockSpec((T, C), lambda b, h: (b, 0)),
            scratch_shapes=[pltpu.VMEM((T, C), jnp.float32)],
        ),
        compiler_params=pltpu.CompilerParams(
            dimension_semantics=("parallel", "arbitrary"),
            vmem_limit_bytes=_vmem_limit_bytes(),
        ),
        cost_estimate=cost,
    )(x_flat, wqkv_h, wp_h, bproj)

    return out_flat.reshape(B, N, C)


# --------------------------------------------------------------------------- #
# Pure-jnp reference (mirrors the PyTorch code path)
# --------------------------------------------------------------------------- #
def ref_forward(x, H, W, params, *, num_heads, sr=1, qk_scale=None):
    B, N, C = x.shape
    if sr > 1:
        xi = jnp.transpose(x, (0, 2, 1)).reshape(B, C, H, W)
        xi = xi[:, :, ::sr, ::sr]
        x = jnp.transpose(xi.reshape(B, C, -1), (0, 2, 1))
        N = x.shape[1]
    head_dim = C // num_heads
    scale = qk_scale if qk_scale is not None else head_dim ** (-0.5)

    qkv = x @ params["wqkv"]
    qkv = qkv.reshape(B, N, 3, num_heads, head_dim)
    qkv = jnp.transpose(qkv, (2, 0, 3, 1, 4))
    q, k, v = qkv[0], qkv[1], qkv[2]
    attn = jnp.einsum("bhnd,bhmd->bhnm", q, k) * scale
    attn = jax.nn.softmax(attn, axis=-1)
    y = jnp.einsum("bhnm,bhmd->bhnd", attn, v)
    y = jnp.transpose(y, (0, 2, 1, 3)).reshape(B, N, C)
    return y @ params["wproj"] + params["bproj"]


if __name__ == "__main__":
    # Small config consistent with the module: dim=32, num_heads=4, H=W=8 -> N=64.
    B, Hsp, Wsp, C = 2, 8, 8, 32
    num_heads = 4
    N = Hsp * Wsp

    key = jax.random.PRNGKey(0)
    kx, kqkv, kpw, kpb = jax.random.split(key, 4)
    x = jax.random.normal(kx, (B, N, C), dtype=jnp.float32)

    params = {
        # Deterministic synthetic weights (stored as (in, out) == torch W.T).
        "wqkv": 0.05 * jax.random.normal(kqkv, (C, 3 * C), dtype=jnp.float32),
        "wproj": 0.05 * jax.random.normal(kpw, (C, C), dtype=jnp.float32),
        "bproj": 0.05 * jax.random.normal(kpb, (C,), dtype=jnp.float32),
    }

    # Tolerance relaxed from 1e-5 because softmax normalisation uses the EUP
    # approx reciprocal (pl.reciprocal(..., approx=True)); expected error << 1e-3.
    for sr in (1, 2):
        out = global_sparse_attn(x, Hsp, Wsp, params, num_heads=num_heads, sr=sr)
        out = jax.block_until_ready(out)
        ref = ref_forward(x, Hsp, Wsp, params, num_heads=num_heads, sr=sr)
        np.testing.assert_allclose(np.asarray(out), np.asarray(ref),
                                   rtol=2e-3, atol=2e-3)

    print("KERNEL_OK")
</pallas_src>

<mosaic_0001>
module attributes {stable_mosaic.version = 11 : i64} {
  func.func @_attn_kernel(%arg0: i32, %arg1: i32, %arg2: memref<128x32xf32, #tpu.memory_space<vmem>>, %arg3: memref<1x32x24xf32, #tpu.memory_space<vmem>>, %arg4: memref<1x8x32xf32, #tpu.memory_space<vmem>>, %arg5: memref<1x32xf32, #tpu.memory_space<vmem>>, %arg6: memref<128x32xf32, #tpu.memory_space<vmem>>, %arg7: memref<128x32xf32, #tpu.memory_space<vmem>>) attributes {dimension_semantics = [#tpu.dimension_semantics<parallel>, #tpu.dimension_semantics<arbitrary>], iteration_bounds = array<i64: 1, 4>, scalar_prefetch = 0 : i64, scratch_operands = 1 : i64, tpu.core_type = #tpu.core_type<tc>, window_params = [{transform_indices = @transform_0, window_bounds = array<i64: 128, 32>}, {transform_indices = @transform_1, window_bounds = array<i64: 1, 32, 24>}, {transform_indices = @transform_2, window_bounds = array<i64: 1, 8, 32>}, {pipeline_mode = #tpu.pipeline_mode<synchronous>, transform_indices = @transform_3, window_bounds = array<i64: 1, 32>}, {transform_indices = @transform_4, window_bounds = array<i64: 128, 32>}]} {
    %c0_i32 = arith.constant 0 : i32
    %0 = arith.cmpi eq, %arg1, %c0_i32 : i32
    %1 = arith.extui %0 : i1 to i32
    %c0_i32_0 = arith.constant 0 : i32
    %2 = arith.cmpi ne, %1, %c0_i32_0 : i32
    scf.if %2 {
      %cst_18 = arith.constant 0.000000e+00 : f32
      %33 = vector.broadcast %cst_18 : f32 to vector<128x32xf32>
      %c0_19 = arith.constant 0 : index
      %c0_20 = arith.constant 0 : index
      %34 = vector.load %arg7[%c0_19, %c0_20] : memref<128x32xf32, #tpu.memory_space<vmem>>, vector<128x32xf32>
      tpu.vector_store %arg7[%c0_19, %c0_20], %33 {strides = array<i32>} : memref<128x32xf32, #tpu.memory_space<vmem>>, vector<128x32xf32>,
    } else {
    }
    %c0 = arith.constant 0 : index
    %c0_1 = arith.constant 0 : index
    %3 = vector.load %arg2[%c0, %c0_1] : memref<128x32xf32, #tpu.memory_space<vmem>>, vector<128x32xf32>
    %c0_2 = arith.constant 0 : index
    %c0_3 = arith.constant 0 : index
    %c0_4 = arith.constant 0 : index
    %4 = vector.load %arg3[%c0_2, %c0_3, %c0_4] : memref<1x32x24xf32, #tpu.memory_space<vmem>>, vector<1x32x24xf32>
    %5 = vector.shape_cast %4 : vector<1x32x24xf32> to vector<32x24xf32>
    %cst = arith.constant dense<0.000000e+00> : vector<128x24xf32>
    %6 = tpu.matmul %3, %5, %cst {dimension_numbers = #tpu.dot_dimension_numbers<[1], [0], [0], [1], [0, 0, 1, 1], [], []>} : vector<128x32xf32>, vector<32x24xf32>, vector<128x24xf32> -> vector<128x24xf32>
    %7 = vector.shape_cast %6 : vector<128x24xf32> to vector<2x64x24xf32>
    %8 = vector.extract_strided_slice %7 {offsets = [0, 0, 0], sizes = [2, 64, 8], strides = [1, 1, 1]} : vector<2x64x24xf32> to vector<2x64x8xf32>
    %9 = vector.extract_strided_slice %7 {offsets = [0, 0, 8], sizes = [2, 64, 8], strides = [1, 1, 1]} : vector<2x64x24xf32> to vector<2x64x8xf32>
    %10 = vector.extract_strided_slice %7 {offsets = [0, 0, 16], sizes = [2, 64, 8], strides = [1, 1, 1]} : vector<2x64x24xf32> to vector<2x64x8xf32>
    "tpu.trace_start"() <{level = 10 : i32, message = "bnd,bmd->bnm"}> : () -> ()
    %cst_5 = arith.constant dense<0.000000e+00> : vector<2x64x64xf32>
    %11 = tpu.matmul %8, %9, %cst_5 {dimension_numbers = #tpu.dot_dimension_numbers<[2], [2], [1], [1], [0, 0, 0, 1, 1, 1], [0], [0]>} : vector<2x64x8xf32>, vector<2x64x8xf32>, vector<2x64x64xf32> -> vector<2x64x64xf32>
    "tpu.trace_stop"() : () -> ()
    %cst_6 = arith.constant dense<0xFF800000> : vector<2x64xf32>
    %12 = vector.multi_reduction <maximumf>, %11, %cst_6 [2] : vector<2x64x64xf32> to vector<2x64xf32>
    %13 = vector.shape_cast %12 : vector<2x64xf32> to vector<2x64x1xf32>
    %14 = vector.broadcast %13 : vector<2x64x1xf32> to vector<2x64x64xf32>
    %15 = arith.subf %11, %14 : vector<2x64x64xf32>
    %16 = math.exp %15 : vector<2x64x64xf32>
    %cst_7 = arith.constant dense<0.000000e+00> : vector<2x64xf32>
    %17 = vector.multi_reduction <add>, %16, %cst_7 [2] : vector<2x64x64xf32> to vector<2x64xf32>
    %18 = vector.shape_cast %17 : vector<2x64xf32> to vector<2x64x1xf32>
    "tpu.trace_start"() <{level = 10 : i32, message = "bnm,bmd->bnd"}> : () -> ()
    %cst_8 = arith.constant dense<0.000000e+00> : vector<2x64x8xf32>
    %19 = tpu.matmul %16, %10, %cst_8 {dimension_numbers = #tpu.dot_dimension_numbers<[2], [1], [1], [2], [0, 0, 0, 1, 1, 2], [0], [0]>} : vector<2x64x64xf32>, vector<2x64x8xf32>, vector<2x64x8xf32> -> vector<2x64x8xf32>
    "tpu.trace_stop"() : () -> ()
    %20 = tpu.reciprocal %18 {approx = true} : vector<2x64x1xf32> -> vector<2x64x1xf32>
    %21 = vector.broadcast %20 : vector<2x64x1xf32> to vector<2x64x8xf32>
    %22 = arith.mulf %19, %21 : vector<2x64x8xf32>
    %c0_9 = arith.constant 0 : index
    %c0_10 = arith.constant 0 : index
    %23 = vector.load %arg7[%c0_9, %c0_10] : memref<128x32xf32, #tpu.memory_space<vmem>>, vector<128x32xf32>
    %24 = vector.shape_cast %22 : vector<2x64x8xf32> to vector<128x8xf32>
    %c0_11 = arith.constant 0 : index
    %c0_12 = arith.constant 0 : index
    %c0_13 = arith.constant 0 : index
    %25 = vector.load %arg4[%c0_11, %c0_12, %c0_13] : memref<1x8x32xf32, #tpu.memory_space<vmem>>, vector<1x8x32xf32>
    %26 = vector.shape_cast %25 : vector<1x8x32xf32> to vector<8x32xf32>
    %cst_14 = arith.constant dense<0.000000e+00> : vector<128x32xf32>
    %27 = tpu.matmul %24, %26, %cst_14 {dimension_numbers = #tpu.dot_dimension_numbers<[1], [0], [0], [1], [0, 0, 1, 1], [], []>} : vector<128x8xf32>, vector<8x32xf32>, vector<128x32xf32> -> vector<128x32xf32>
    %28 = arith.addf %23, %27 : vector<128x32xf32>
    %c0_15 = arith.constant 0 : index
    %c0_16 = arith.constant 0 : index
    %29 = vector.load %arg7[%c0_15, %c0_16] : memref<128x32xf32, #tpu.memory_space<vmem>>, vector<128x32xf32>
    tpu.vector_store %arg7[%c0_15, %c0_16], %28 {strides = array<i32>} : memref<128x32xf32, #tpu.memory_space<vmem>>, vector<128x32xf32>,
    %c3_i32 = arith.constant 3 : i32
    %30 = arith.cmpi eq, %arg1, %c3_i32 : i32
    %31 = arith.extui %30 : i1 to i32
    %c0_i32_17 = arith.constant 0 : i32
    %32 = arith.cmpi ne, %31, %c0_i32_17 : i32
    scf.if %32 {
      %c0_18 = arith.constant 0 : index
      %c0_19 = arith.constant 0 : index
      %33 = vector.load %arg7[%c0_18, %c0_19] : memref<128x32xf32, #tpu.memory_space<vmem>>, vector<128x32xf32>
      %c0_20 = arith.constant 0 : index
      %c0_21 = arith.constant 0 : index
      %34 = vector.load %arg5[%c0_20, %c0_21] : memref<1x32xf32, #tpu.memory_space<vmem>>, vector<1x32xf32>
      %35 = vector.broadcast %34 : vector<1x32xf32> to vector<128x32xf32>
      %36 = arith.addf %33, %35 : vector<128x32xf32>
      %c0_22 = arith.constant 0 : index
      %c0_23 = arith.constant 0 : index
      %37 = vector.load %arg6[%c0_22, %c0_23] : memref<128x32xf32, #tpu.memory_space<vmem>>, vector<128x32xf32>
      tpu.vector_store %arg6[%c0_22, %c0_23], %36 {strides = array<i32>} : memref<128x32xf32, #tpu.memory_space<vmem>>, vector<128x32xf32>,
    } else {
    }
    return
  }
  func.func @transform_0(%arg0: i32, %arg1: i32) -> (i32, i32) {
    %c0_i32 = arith.constant 0 : i32
    %c0_i32_0 = arith.constant 0 : i32
    return %arg0, %c0_i32 : i32, i32
  }
  func.func @transform_1(%arg0: i32, %arg1: i32) -> (i32, i32, i32) {
    %c0_i32 = arith.constant 0 : i32
    %c0_i32_0 = arith.constant 0 : i32
    %c0_i32_1 = arith.constant 0 : i32
    return %arg1, %c0_i32, %c0_i32_0 : i32, i32, i32
  }
  func.func @transform_2(%arg0: i32, %arg1: i32) -> (i32, i32, i32) {
    %c0_i32 = arith.constant 0 : i32
    %c0_i32_0 = arith.constant 0 : i32
    %c0_i32_1 = arith.constant 0 : i32
    return %arg1, %c0_i32, %c0_i32_0 : i32, i32, i32
  }
  func.func @transform_3(%arg0: i32, %arg1: i32) -> (i32, i32) {
    %c0_i32 = arith.constant 0 : i32
    %c0_i32_0 = arith.constant 0 : i32
    %c0_i32_1 = arith.constant 0 : i32
    return %c0_i32, %c0_i32_0 : i32, i32
  }
  func.func @transform_4(%arg0: i32, %arg1: i32) -> (i32, i32) {
    %c0_i32 = arith.constant 0 : i32
    %c0_i32_0 = arith.constant 0 : i32
    return %arg0, %c0_i32 : i32, i32
  }
}

</mosaic_0001>

<llo_original>
// kernel: tpu_custom_call.1
$region0: #{tpu_custom_call.1}
  #allocation0 [shape = 'u32[]', space=smem, size = 0x4, offset = 0x4, fixed_abs, tag = 'smem constant byte address 0x4 - core index']
  #allocation1 [shape = 'u32[144,128]{1,0:T(1,128)}', space=vmem, size = 0x12000, scoped, tag = 'internal scratch']
  #allocation2 [shape = 'f32[128,32]{1,0:T(8,128)}', space=vmem, size = 0x10000, scoped, tag = 'scratch operand']
  %s0 = inlined_call_operand.vmem [shape: f32[128,32], index: 0, kind: input, shape index: {}]
  %s1 = inlined_call_operand.vmem [shape: f32[4,32,24], index: 1, kind: input, shape index: {}]
  %s2 = inlined_call_operand.vmem [shape: f32[4,8,32], index: 2, kind: input, shape index: {}]
  %s3 = inlined_call_operand.vmem [shape: f32[1,32], index: 3, kind: input, shape index: {}]
  %s4 = inlined_call_operand.vmem [shape: f32[128,32], index: 4, kind: output, shape index: {}]
  %s5 = sld [smem:[#allocation0]]
  $region57: #{tpu_custom_call.1} parent=0
    _
  %s7 = ssub.s32 1, %s5
  %s8 = scalar_select 0, %s7, %s5
  loop: start=0, step=1, limit=6
  $region2: #{tpu_custom_call.1} parent=0 // loop_pre_header
    _
  $region3: #{tpu_custom_call.1} parent=0 // loop_header
    %s10 = sphi 0, %s14
    %p11 = scmp.ge.s32.totalorder %s10, 6
    %s17 = sphi 0, %s29
    %s18 = sphi 0, %s25
    %s19 = sphi 0, %s17
    %s20 = sphi 0, %s18
    %s21 = sphi 0, %s19
    %s22 = sphi 0, %s20
    %s32 = sphi 0, %s34
    %s35 = sphi 0, %s32
    %s36 = sphi 0, %s35
    %s52 = sphi 0, %s36
    %s58 = sphi 0, %s60
    %s61 = sphi 0, %s58
    %s62 = sphi 0, %s61
    %s78 = sphi 0, %s62
    %s84 = sphi 0, %s86
    %s87 = sphi 0, %s84
    %s88 = sphi 0, %s87
    %s104 = sphi 0, %s88
    %s108 = sphi 0, %s108
    %s110 = sphi 0, %s108
    %s111 = sphi 0, %s110
    %s125 = sphi 0, %s111
    %s131 = sphi 0, %s133
    %s134 = sphi 0, %s131
    %s135 = sphi 0, %s134
    %s151 = sphi 0, %s135
  $region4: #{tpu_custom_call.1} parent=0 // loop_header_branch
    %13 = sbr.rel (%p11) target = $region8
  $region5: #{tpu_custom_call.1} parent=0 // loop_body
    %s15 = ssub.s32 %s10, 1
    %s16 = ssub.s32 %s10, 2
    %s23 = sadd.s32 1, %s18
    %p24 = scmp.ge.s32.totalorder %s23, 4
    %s25 = scalar_select %p24, 0, %s23
    %s26 = sadd.s32 1, %s17
    %s27 = scalar_select %p24, %s26, %s17
    %p28 = scmp.ge.s32.totalorder %s27, 1
    %s29 = scalar_select %p28, 0, %s27
    %s30 = ssub.s32 %s17, %s29
    %p31 = scmp.eq.s32.totalorder %s30, 0
    %s33 = sadd.s32 %s32, 1
    %s34 = scalar_select %p31, %s32, %s33
    %p37 = pneg %p31
    %p38 = scmp.eq.s32.totalorder %s10, 3
    %p39 = por %p37, %p38
    %p40 = scmp.ne.s32.totalorder %s32, %s35
    %p41 = scmp.eq.s32.totalorder %s10, 0
    %p42 = por %p40, %p41
    %p43 = scmp.ne.s32.totalorder %s32, %s35
    %p44 = scmp.eq.s32.totalorder %s15, 3
    %p45 = por %p43, %p44
    %p46 = scmp.ne.s32.totalorder %s35, %s36
    %p47 = scmp.eq.s32.totalorder %s15, 0
    %p48 = por %p46, %p47
    %p49 = scmp.ne.s32.totalorder %s35, %s36
    %p50 = scmp.eq.s32.totalorder %s16, 3
    %p51 = por %p49, %p50
    %p53 = scmp.ne.s32.totalorder %s36, %s52
    %p54 = scmp.eq.s32.totalorder %s16, 0
    %p55 = por %p53, %p54
    %s56 = ssub.s32 %s18, %s25
    %p57 = scmp.eq.s32.totalorder %s56, 0
    %s59 = sadd.s32 %s58, 1
    %s60 = scalar_select %p57, %s58, %s59
    %p63 = pneg %p57
    %p64 = scmp.eq.s32.totalorder %s10, 3
    %p65 = por %p63, %p64
    %p66 = scmp.ne.s32.totalorder %s58, %s61
    %p67 = scmp.eq.s32.totalorder %s10, 0
    %p68 = por %p66, %p67
    %p69 = scmp.ne.s32.totalorder %s58, %s61
    %p70 = scmp.eq.s32.totalorder %s15, 3
    %p71 = por %p69, %p70
    %p72 = scmp.ne.s32.totalorder %s61, %s62
    %p73 = scmp.eq.s32.totalorder %s15, 0
    %p74 = por %p72, %p73
    %p75 = scmp.ne.s32.totalorder %s61, %s62
    %p76 = scmp.eq.s32.totalorder %s16, 3
    %p77 = por %p75, %p76
    %p79 = scmp.ne.s32.totalorder %s62, %s78
    %p80 = scmp.eq.s32.totalorder %s16, 0
    %p81 = por %p79, %p80
    %s82 = ssub.s32 %s18, %s25
    %p83 = scmp.eq.s32.totalorder %s82, 0
    %s85 = sadd.s32 %s84, 1
    %s86 = scalar_select %p83, %s84, %s85
    %p89 = pneg %p83
    %p90 = scmp.eq.s32.totalorder %s10, 3
    %p91 = por %p89, %p90
    %p92 = scmp.ne.s32.totalorder %s84, %s87
    %p93 = scmp.eq.s32.totalorder %s10, 0
    %p94 = por %p92, %p93
    %p95 = scmp.ne.s32.totalorder %s84, %s87
    %p96 = scmp.eq.s32.totalorder %s15, 3
    %p97 = por %p95, %p96
    %p98 = scmp.ne.s32.totalorder %s87, %s88
    %p99 = scmp.eq.s32.totalorder %s15, 0
    %p100 = por %p98, %p99
    %p101 = scmp.ne.s32.totalorder %s87, %s88
    %p102 = scmp.eq.s32.totalorder %s16, 3
    %p103 = por %p101, %p102
    %p105 = scmp.ne.s32.totalorder %s88, %s104
    %p106 = scmp.eq.s32.totalorder %s16, 0
    %p107 = por %p105, %p106
    %s109 = sadd.s32 %s108, 1
    %p112 = scmp.eq.s32.totalorder %s10, 3
    %p113 = scmp.ne.s32.totalorder %s108, %s110
    %p114 = scmp.eq.s32.totalorder %s10, 0
    %p115 = por %p113, %p114
    %p116 = scmp.ne.s32.totalorder %s108, %s110
    %p117 = scmp.eq.s32.totalorder %s15, 3
    %p118 = por %p116, %p117
    %p119 = scmp.ne.s32.totalorder %s110, %s111
    %p120 = scmp.eq.s32.totalorder %s15, 0
    %p121 = por %p119, %p120
    %p122 = scmp.ne.s32.totalorder %s110, %s111
    %p123 = scmp.eq.s32.totalorder %s16, 3
    %p124 = por %p122, %p123
    %p126 = scmp.ne.s32.totalorder %s111, %s125
    %p127 = scmp.eq.s32.totalorder %s16, 0
    %p128 = por %p126, %p127
    %s129 = ssub.s32 %s17, %s29
    %p130 = scmp.eq.s32.totalorder %s129, 0
    %s132 = sadd.s32 %s131, 1
    %s133 = scalar_select %p130, %s131, %s132
    %p136 = pneg %p130
    %p137 = scmp.eq.s32.totalorder %s10, 3
    %p138 = por %p136, %p137
    %p139 = scmp.ne.s32.totalorder %s131, %s134
    %p140 = scmp.eq.s32.totalorder %s10, 0
    %p141 = por %p139, %p140
    %p142 = scmp.ne.s32.totalorder %s131, %s134
    %p143 = scmp.eq.s32.totalorder %s15, 3
    %p144 = por %p142, %p143
    %p145 = scmp.ne.s32.totalorder %s134, %s135
    %p146 = scmp.eq.s32.totalorder %s15, 0
    %p147 = por %p145, %p146
    %p148 = scmp.ne.s32.totalorder %s134, %s135
    %p149 = scmp.eq.s32.totalorder %s16, 3
    %p150 = por %p148, %p149
    %p152 = scmp.ne.s32.totalorder %s135, %s151
    %p153 = scmp.eq.s32.totalorder %s16, 0
    %p154 = por %p152, %p153
    %p155 = scmp.le.s32.totalorder 1, %s10
    %p156 = scmp.lt.s32.totalorder %s10, 5
    %p157 = pnand %p155, %p156
    %p158 = pneg %p157
    // Predicated region
    $region9: #{tpu_custom_call.1} parent=5 // pred_check
      _
    $region10: #{tpu_custom_call.1} parent=5 // pred_check_branch
      %160 = sbr.rel (%p157) target = $region12
    $region11: #{tpu_custom_call.1} parent=5 // pred_region
      %s161 = ssub.s32 %s10, 1
      // Predicated region
      $region13: #{tpu_custom_call.1} parent=11 // pred_check
        %p162 = pneg %p48
      $region14: #{tpu_custom_call.1} parent=11 // pred_check_branch
        %164 = sbr.rel (%p162) target = $region16
      $region15: #{tpu_custom_call.1} parent=11 // pred_region
        %s165 = smul.u32 16, %s19
        %p166 = scmp.lt.s32.totalorder %s165, 15
        %s167 = scalar_select %p166, %s165, 15
        %s168 = smul.addr %s167, 8
        %s169 = scalar_lea.vmem %s0, %s168
        %s170 = smul.u32 16, %s19
      $region16: #{tpu_custom_call.1} parent=11 // pred_fallthru
        _
      // Predicated region
      $region17: #{tpu_custom_call.1} parent=11 // pred_check
        %p171 = pneg %p121
      $region18: #{tpu_custom_call.1} parent=11 // pred_check_branch
        %173 = sbr.rel (%p171) target = $region20
      $region19: #{tpu_custom_call.1} parent=11 // pred_region
        _
      $region20: #{tpu_custom_call.1} parent=11 // pred_fallthru
        _
    $region12: #{tpu_custom_call.1} parent=5 // pred_fallthru
      _
    %p174 = scmp.lt.s32.totalorder %s10, 4
    // Predicated region
    $region21: #{tpu_custom_call.1} parent=5 // pred_check
      %p175 = pneg %p174
    $region22: #{tpu_custom_call.1} parent=5 // pred_check_branch
      %177 = sbr.rel (%p175) target = $region24
    $region23: #{tpu_custom_call.1} parent=5 // pred_region
      // Predicated region
      $region25: #{tpu_custom_call.1} parent=23 // pred_check
        %p178 = pneg %p68
      $region26: #{tpu_custom_call.1} parent=23 // pred_check_branch
        %180 = sbr.rel (%p178) target = $region28
      $region27: #{tpu_custom_call.1} parent=23 // pred_region
        %p181 = scmp.lt.s32.totalorder %s18, 3
        %s182 = scalar_select %p181, %s18, 3
        %s183 = smul.addr %s182, 4
        %s184 = smul.addr %s183, 8
        %s185 = scalar_lea.vmem %s1, %s184
      $region28: #{tpu_custom_call.1} parent=23 // pred_fallthru
        _
      // Predicated region
      $region29: #{tpu_custom_call.1} parent=23 // pred_check
        %p186 = pneg %p94
      $region30: #{tpu_custom_call.1} parent=23 // pred_check_branch
        %188 = sbr.rel (%p186) target = $region32
      $region31: #{tpu_custom_call.1} parent=23 // pred_region
        %p189 = scmp.lt.s32.totalorder %s18, 3
        %s190 = scalar_select %p189, %s18, 3
        %s191 = smul.addr %s190, 8
        %s192 = scalar_lea.vmem %s2, %s191
      $region32: #{tpu_custom_call.1} parent=23 // pred_fallthru
        _
    $region24: #{tpu_custom_call.1} parent=5 // pred_fallthru
      _
    %p193 = scmp.le.s32.totalorder 1, %s10
    %p194 = scmp.lt.s32.totalorder %s10, 5
    %p195 = pnand %p193, %p194
    %p196 = pneg %p195
    // Predicated region
    $region33: #{tpu_custom_call.1} parent=5 // pred_check
      _
    $region34: #{tpu_custom_call.1} parent=5 // pred_check_branch
      %198 = sbr.rel (%p195) target = $region36
    $region35: #{tpu_custom_call.1} parent=5 // pred_region
      %s199 = ssub.s32 %s10, 1
      %s200 = smul.u32 16, %s19
      %p201 = scmp.lt.s32.totalorder %s200, 15
      %s202 = scalar_select %p201, %s200, 15
      %s203 = smul.addr %s202, 8
      %s204 = scalar_lea.vmem %s0, %s203
      %p205 = pneg %p48
      %p206 = pneg %p45
      %p207 = scmp.lt.s32.totalorder %s20, 3
      %s208 = scalar_select %p207, %s20, 3
      %s209 = smul.addr %s208, 4
      %s210 = smul.addr %s209, 8
      %s211 = scalar_lea.vmem %s1, %s210
      %p212 = pneg %p74
      %p213 = pneg %p71
      %p214 = scmp.lt.s32.totalorder %s20, 3
      %s215 = scalar_select %p214, %s20, 3
      %s216 = smul.addr %s215, 8
      %s217 = scalar_lea.vmem %s2, %s216
      %p218 = pneg %p100
      %p219 = pneg %p97
      %p220 = pneg %p121
      %p221 = pneg %p118
      %p222 = pneg %p147
      %p223 = pneg %p144
      %s224 = smul.u32 16, %s19
      %p225 = scmp.lt.s32.totalorder %s224, 15
      %s226 = scalar_select %p225, %s224, 15
      %s227 = smul.addr %s226, 8
      %s228 = scalar_lea.vmem %s4, %s227
      %s229 = smul.u32 16, %s19
      %p230 = scmp.lt.s32.totalorder %s229, 15
      %s231 = scalar_select %p230, %s229, 15
      %s232 = smul.addr %s231, 8
      %s233 = scalar_lea.vmem %s0, %s232
      %s234 = smul.u32 16, %s19
      %p235 = scmp.lt.s32.totalorder %s20, 3
      %s236 = scalar_select %p235, %s20, 3
      %s237 = smul.addr %s236, 4
      %s238 = smul.addr %s237, 8
      %s239 = scalar_lea.vmem %s1, %s238
      %p240 = scmp.lt.s32.totalorder %s20, 3
      %s241 = scalar_select %p240, %s20, 3
      %s242 = smul.addr %s241, 8
      %s243 = scalar_lea.vmem %s2, %s242
      %s244 = smul.u32 16, %s19
      %p245 = scmp.lt.s32.totalorder %s244, 15
      %s246 = scalar_select %p245, %s244, 15
      %s247 = smul.addr %s246, 8
      %s248 = scalar_lea.vmem %s4, %s247
      %s249 = smul.u32 16, %s19
      %p250 = scmp.eq.s32.totalorder %s20, 0
      // Predicated region
      $region37: #{tpu_custom_call.1} parent=35 // pred_check
        %p251 = pneg %p250
      $region38: #{tpu_custom_call.1} parent=35 // pred_check_branch
        %253 = sbr.rel (%p251) target = $region40
      $region39: #{tpu_custom_call.1} parent=35 // pred_region
        %vm254 = vcmask 261120
        %255 = vst.msk [vmem:[#allocation2] sm:$0xff] %vm254, 0.0
        %256 = vst.msk [vmem:[#allocation2 + $0x8] sm:$0xff] %vm254, 0.0
        %257 = vst.msk [vmem:[#allocation2 + $0x10] sm:$0xff] %vm254, 0.0
        %258 = vst.msk [vmem:[#allocation2 + $0x18] sm:$0xff] %vm254, 0.0
        %259 = vst.msk [vmem:[#allocation2 + $0x20] sm:$0xff] %vm254, 0.0
        %260 = vst.msk [vmem:[#allocation2 + $0x28] sm:$0xff] %vm254, 0.0
        %261 = vst.msk [vmem:[#allocation2 + $0x30] sm:$0xff] %vm254, 0.0
        %262 = vst.msk [vmem:[#allocation2 + $0x38] sm:$0xff] %vm254, 0.0
        %263 = vst.msk [vmem:[#allocation2 + $0x40] sm:$0xff] %vm254, 0.0
        %264 = vst.msk [vmem:[#allocation2 + $0x48] sm:$0xff] %vm254, 0.0
        %265 = vst.msk [vmem:[#allocation2 + $0x50] sm:$0xff] %vm254, 0.0
        %266 = vst.msk [vmem:[#allocation2 + $0x58] sm:$0xff] %vm254, 0.0
        %267 = vst.msk [vmem:[#allocation2 + $0x60] sm:$0xff] %vm254, 0.0
        %268 = vst.msk [vmem:[#allocation2 + $0x68] sm:$0xff] %vm254, 0.0
        %269 = vst.msk [vmem:[#allocation2 + $0x70] sm:$0xff] %vm254, 0.0
        %270 = vst.msk [vmem:[#allocation2 + $0x78] sm:$0xff] %vm254, 0.0
      $region40: #{tpu_custom_call.1} parent=35 // pred_fallthru
        _
      %v271 = vld [vmem:[%s233] sm:$0xff]
      %v272 = vld [vmem:[%s233 + $0x8] sm:$0xff]
      %v273 = vld [vmem:[%s233 + $0x10] sm:$0xff]
      %v274 = vld [vmem:[%s233 + $0x18] sm:$0xff]
      %v275 = vld [vmem:[%s233 + $0x20] sm:$0xff]
      %v276 = vld [vmem:[%s233 + $0x28] sm:$0xff]
      %v277 = vld [vmem:[%s233 + $0x30] sm:$0xff]
      %v278 = vld [vmem:[%s233 + $0x38] sm:$0xff]
      %v279 = vld [vmem:[%s233 + $0x40] sm:$0xff]
      %v280 = vld [vmem:[%s233 + $0x48] sm:$0xff]
      %v281 = vld [vmem:[%s233 + $0x50] sm:$0xff]
      %v282 = vld [vmem:[%s233 + $0x58] sm:$0xff]
      %v283 = vld [vmem:[%s233 + $0x60] sm:$0xff]
      %v284 = vld [vmem:[%s233 + $0x68] sm:$0xff]
      %v285 = vld [vmem:[%s233 + $0x70] sm:$0xff]
      %v286 = vld [vmem:[%s233 + $0x78] sm:$0xff]
      %v287 = vld [vmem:[%s239] sm:$0xff]
      %v288 = vld [vmem:[%s239 + $0x8] sm:$0xff]
      %v289 = vld [vmem:[%s239 + $0x10] sm:$0xff]
      %v290 = vld [vmem:[%s239 + $0x18] sm:$0xff]
      %vm291 = vcmask 261120
      %v293 = vsel %vm291, %v271, 0
      %v296 = vsel %vm291, %v272, 0
      %v299 = vsel %vm291, %v273, 0
      %v302 = vsel %vm291, %v274, 0
      %v305 = vsel %vm291, %v275, 0
      %v308 = vsel %vm291, %v276, 0
      %v311 = vsel %vm291, %v277, 0
      %v314 = vsel %vm291, %v278, 0
      %v317 = vsel %vm291, %v279, 0
      %v320 = vsel %vm291, %v280, 0
      %v323 = vsel %vm291, %v281, 0
      %v326 = vsel %vm291, %v282, 0
      %v329 = vsel %vm291, %v283, 0
      %v332 = vsel %vm291, %v284, 0
      %v335 = vsel %vm291, %v285, 0
      %v338 = vsel %vm291, %v286, 0
      %340 = vmatprep.subr.mxu0 0.0
      %341 = vmatpush1.msra.mxu0 %v287
      %342 = vmatprep.subr.mxu0 0.0
      %343 = vmatpush1.msra.mxu0 %v288
      %344 = vmatprep.subr.mxu0 0.0
      %345 = vmatpush1.msra.mxu0 %v289
      %346 = vmatprep.subr.mxu0 0.0
      %347 = vmatpush1.msra.mxu0 %v290
      %348 = vmatprep.subr.mxu0 0.0
      %349 = vmatpush1.msra.mxu0 0.0
      %350 = vmatprep.subr.mxu0 0.0
      %351 = vmatpush1.msra.mxu0 0.0
      %352 = vmatprep.subr.mxu0 0.0
      %353 = vmatpush1.msra.mxu0 0.0
      %354 = vmatprep.subr.mxu0 0.0
      %355 = vmatpush1.msra.mxu0 0.0
      %356 = vmatprep.subr.mxu0 0.0
      %357 = vmatpush1.msra.mxu0 0.0
      %358 = vmatprep.subr.mxu0 0.0
      %359 = vmatpush1.msra.mxu0 0.0
      %360 = vmatprep.subr.mxu0 0.0
      %361 = vmatpush1.msra.mxu0 0.0
      %362 = vmatprep.subr.mxu0 0.0
      %363 = vmatpush1.msra.mxu0 0.0
      %364 = vmatprep.subr.mxu0 0.0
      %365 = vmatpush1.msra.mxu0 0.0
      %366 = vmatprep.subr.mxu0 0.0
      %367 = vmatpush1.msra.mxu0 0.0
      %368 = vmatprep.subr.mxu0 0.0
      %369 = vmatpush1.msra.mxu0 0.0
      %370 = vmatprep.subr.mxu0 0.0
      %371 = vmatpush1.msra.mxu0 0.0
      %372 = vmatprep.subr.mxu0 0.0
      %373 = vmatpush1.msra.mxu0 0.0
      %374 = vmatprep.subr.mxu0 0.0
      %375 = vmatpush1.msra.mxu0 0.0
      %376 = vmatprep.subr.mxu0 0.0
      %377 = vmatpush1.msra.mxu0 0.0
      %378 = vmatprep.subr.mxu0 0.0
      %379 = vmatpush1.msra.mxu0 0.0
      %380 = vmatprep.subr.mxu0 0.0
      %381 = vmatpush1.msra.mxu0 0.0
      %382 = vmatprep.subr.mxu0 0.0
      %383 = vmatpush1.msra.mxu0 0.0
      %384 = vmatprep.subr.mxu0 0.0
      %385 = vmatpush1.msra.mxu0 0.0
      %386 = vmatprep.subr.mxu0 0.0
      %387 = vmatpush1.msra.mxu0 0.0
      %388 = vmatprep.subr.mxu0 0.0
      %389 = vmatpush1.msra.mxu0 0.0
      %390 = vmatprep.subr.mxu0 0.0
      %391 = vmatpush1.msra.mxu0 0.0
      %392 = vmatprep.subr.mxu0 0.0
      %393 = vmatpush1.msra.mxu0 0.0
      %394 = vmatprep.subr.mxu0 0.0
      %395 = vmatpush1.msra.mxu0 0.0
      %396 = vmatprep.subr.mxu0 0.0
      %397 = vmatpush1.msra.mxu0 0.0
      %398 = vmatprep.subr.mxu0 0.0
      %399 = vmatpush1.msra.mxu0 0.0
      %400 = vmatprep.subr.mxu0 0.0
      %401 = vmatpush1.msra.mxu0 0.0
      %402 = vmatprep.subr.mxu0 0.0
      %403 = vmatpush1.msra.mxu0 0.0
      %404 = vmatprep.mubr.f32.mxu0 0.0
      %405 = vmatmul.mubr.f32.gmra.mrb[0].mxu0 %v293
      %v406 = vpop.f32.mrb[0].mxu0
      %v407 = vadd.f32 0.0, %v406
      %v408 = vpop.f32.mrb[0].mxu0
      %409 = vmatprep.mubr.f32.mxu0 0.0
      %410 = vmatmul.mubr.f32.gmra.mrb[0].mxu0 %v296
      %v411 = vpop.f32.mrb[0].mxu0
      %v412 = vadd.f32 0.0, %v411
      %v413 = vpop.f32.mrb[0].mxu0
      %414 = vmatprep.mubr.f32.mxu0 0.0
      %415 = vmatmul.mubr.f32.gmra.mrb[0].mxu0 %v299
      %v416 = vpop.f32.mrb[0].mxu0
      %v417 = vadd.f32 0.0, %v416
      %v418 = vpop.f32.mrb[0].mxu0
      %419 = vmatprep.mubr.f32.mxu0 0.0
      %420 = vmatmul.mubr.f32.gmra.mrb[0].mxu0 %v302
      %v421 = vpop.f32.mrb[0].mxu0
      %v422 = vadd.f32 0.0, %v421
      %v423 = vpop.f32.mrb[0].mxu0
      %424 = vmatprep.mubr.f32.mxu0 0.0
      %425 = vmatmul.mubr.f32.gmra.mrb[0].mxu0 %v305
      %v426 = vpop.f32.mrb[0].mxu0
      %v427 = vadd.f32 0.0, %v426
      %v428 = vpop.f32.mrb[0].mxu0
      %429 = vmatprep.mubr.f32.mxu0 0.0
      %430 = vmatmul.mubr.f32.gmra.mrb[0].mxu0 %v308
      %v431 = vpop.f32.mrb[0].mxu0
      %v432 = vadd.f32 0.0, %v431
      %v433 = vpop.f32.mrb[0].mxu0
      %434 = vmatprep.mubr.f32.mxu0 0.0
      %435 = vmatmul.mubr.f32.gmra.mrb[0].mxu0 %v311
      %v436 = vpop.f32.mrb[0].mxu0
      %v437 = vadd.f32 0.0, %v436
      %v438 = vpop.f32.mrb[0].mxu0
      %439 = vmatprep.mubr.f32.mxu0 0.0
      %440 = vmatmul.mubr.f32.gmra.mrb[0].mxu0 %v314
      %v441 = vpop.f32.mrb[0].mxu0
      %v442 = vadd.f32 0.0, %v441
      %v443 = vpop.f32.mrb[0].mxu0
      %444 = vmatprep.mubr.f32.mxu0 0.0
      %445 = vmatmul.mubr.f32.gmra.mrb[0].mxu0 %v317
      %v446 = vpop.f32.mrb[0].mxu0
      %v447 = vadd.f32 0.0, %v446
      %v448 = vpop.f32.mrb[0].mxu0
      %449 = vmatprep.mubr.f32.mxu0 0.0
      %450 = vmatmul.mubr.f32.gmra.mrb[0].mxu0 %v320
      %v451 = vpop.f32.mrb[0].mxu0
      %v452 = vadd.f32 0.0, %v451
      %v453 = vpop.f32.mrb[0].mxu0
      %454 = vmatprep.mubr.f32.mxu0 0.0
      %455 = vmatmul.mubr.f32.gmra.mrb[0].mxu0 %v323
      %v456 = vpop.f32.mrb[0].mxu0
      %v457 = vadd.f32 0.0, %v456
      %v458 = vpop.f32.mrb[0].mxu0
      %459 = vmatprep.mubr.f32.mxu0 0.0
      %460 = vmatmul.mubr.f32.gmra.mrb[0].mxu0 %v326
      %v461 = vpop.f32.mrb[0].mxu0
      %v462 = vadd.f32 0.0, %v461
      %v463 = vpop.f32.mrb[0].mxu0
      %464 = vmatprep.mubr.f32.mxu0 0.0
      %465 = vmatmul.mubr.f32.gmra.mrb[0].mxu0 %v329
      %v466 = vpop.f32.mrb[0].mxu0
      %v467 = vadd.f32 0.0, %v466
      %v468 = vpop.f32.mrb[0].mxu0
      %469 = vmatprep.mubr.f32.mxu0 0.0
      %470 = vmatmul.mubr.f32.gmra.mrb[0].mxu0 %v332
      %v471 = vpop.f32.mrb[0].mxu0
      %v472 = vadd.f32 0.0, %v471
      %v473 = vpop.f32.mrb[0].mxu0
      %474 = vmatprep.mubr.f32.mxu0 0.0
      %475 = vmatmul.mubr.f32.gmra.mrb[0].mxu0 %v335
      %v476 = vpop.f32.mrb[0].mxu0
      %v477 = vadd.f32 0.0, %v476
      %v478 = vpop.f32.mrb[0].mxu0
      %479 = vmatprep.mubr.f32.mxu0 0.0
      %480 = vmatmul.mubr.f32.gmra.mrb[0].mxu0 %v338
      %v481 = vpop.f32.mrb[0].mxu0
      %v482 = vadd.f32 0.0, %v481
      %v483 = vpop.f32.mrb[0].mxu0
      %484 = vdwg.mxu0
      %493 = vrot.lane.b32.xlu0 %v407, 120
      %v494 = vpop.permute.xlu0 %493
      %495 = vrot.lane.b32.xlu0 %v412, 120
      %v496 = vpop.permute.xlu0 %495
      %497 = vrot.lane.b32.xlu0 %v417, 120
      %v498 = vpop.permute.xlu0 %497
      %499 = vrot.lane.b32.xlu0 %v422, 120
      %v500 = vpop.permute.xlu0 %499
      %501 = vrot.lane.b32.xlu0 %v427, 120
      %v502 = vpop.permute.xlu0 %501
      %503 = vrot.lane.b32.xlu0 %v432, 120
      %v504 = vpop.permute.xlu0 %503
      %505 = vrot.lane.b32.xlu0 %v437, 120
      %v506 = vpop.permute.xlu0 %505
      %507 = vrot.lane.b32.xlu0 %v442, 120
      %v508 = vpop.permute.xlu0 %507
      %vm509 = vcmask 64512
      %v510 = vsel %vm509, %v407, 0
      %v512 = vsel %vm509, %v412, 0
      %v514 = vsel %vm509, %v417, 0
      %v516 = vsel %vm509, %v422, 0
      %v518 = vsel %vm509, %v427, 0
      %v520 = vsel %vm509, %v432, 0
      %v522 = vsel %vm509, %v437, 0
      %v524 = vsel %vm509, %v442, 0
      %v526 = vsel %vm509, %v494, 0
      %v528 = vsel %vm509, %v496, 0
      %v530 = vsel %vm509, %v498, 0
      %v532 = vsel %vm509, %v500, 0
      %v534 = vsel %vm509, %v502, 0
      %v536 = vsel %vm509, %v504, 0
      %v538 = vsel %vm509, %v506, 0
      %v540 = vsel %vm509, %v508, 0
      %542 = vmatprep.subr.mxu0 0.0
      %543 = vmatpush1.xpose.msra.mxu0 %v526
      %544 = vmatprep.subr.mxu0 0.0
      %545 = vmatpush1.xpose.msra.mxu0 %v528
      %546 = vmatprep.subr.mxu0 0.0
      %547 = vmatpush1.xpose.msra.mxu0 %v530
      %548 = vmatprep.subr.mxu0 0.0
      %549 = vmatpush1.xpose.msra.mxu0 %v532
      %550 = vmatprep.subr.mxu0 0.0
      %551 = vmatpush1.xpose.msra.mxu0 %v534
      %552 = vmatprep.subr.mxu0 0.0
      %553 = vmatpush1.xpose.msra.mxu0 %v536
      %554 = vmatprep.subr.mxu0 0.0
      %555 = vmatpush1.xpose.msra.mxu0 %v538
      %556 = vmatprep.subr.mxu0 0.0
      %557 = vmatpush1.xpose.msra.mxu0 %v540
      %558 = vmatprep.subr.mxu0 0.0
      %559 = vmatpush1.xpose.msra.mxu0 0.0
      %560 = vmatprep.subr.mxu0 0.0
      %561 = vmatpush1.xpose.msra.mxu0 0.0
      %562 = vmatprep.subr.mxu0 0.0
      %563 = vmatpush1.xpose.msra.mxu0 0.0
      %564 = vmatprep.subr.mxu0 0.0
      %565 = vmatpush1.xpose.msra.mxu0 0.0
      %566 = vmatprep.subr.mxu0 0.0
      %567 = vmatpush1.xpose.msra.mxu0 0.0
      %568 = vmatprep.subr.mxu0 0.0
      %569 = vmatpush1.xpose.msra.mxu0 0.0
      %570 = vmatprep.subr.mxu0 0.0
      %571 = vmatpush1.xpose.msra.mxu0 0.0
      %572 = vmatprep.subr.mxu0 0.0
      %573 = vmatpush1.xpose.msra.mxu0 0.0
      %574 = vmatprep.subr.mxu0 0.0
      %575 = vmatpush1.xpose.msra.mxu0 0.0
      %576 = vmatprep.subr.mxu0 0.0
      %577 = vmatpush1.xpose.msra.mxu0 0.0
      %578 = vmatprep.subr.mxu0 0.0
      %579 = vmatpush1.xpose.msra.mxu0 0.0
      %580 = vmatprep.subr.mxu0 0.0
      %581 = vmatpush1.xpose.msra.mxu0 0.0
      %582 = vmatprep.subr.mxu0 0.0
      %583 = vmatpush1.xpose.msra.mxu0 0.0
      %584 = vmatprep.subr.mxu0 0.0
      %585 = vmatpush1.xpose.msra.mxu0 0.0
      %586 = vmatprep.subr.mxu0 0.0
      %587 = vmatpush1.xpose.msra.mxu0 0.0
      %588 = vmatprep.subr.mxu0 0.0
      %589 = vmatpush1.xpose.msra.mxu0 0.0
      %590 = vmatprep.subr.mxu0 0.0
      %591 = vmatpush1.xpose.msra.mxu0 0.0
      %592 = vmatprep.subr.mxu0 0.0
      %593 = vmatpush1.xpose.msra.mxu0 0.0
      %594 = vmatprep.subr.mxu0 0.0
      %595 = vmatpush1.xpose.msra.mxu0 0.0
      %596 = vmatprep.subr.mxu0 0.0
      %597 = vmatpush1.xpose.msra.mxu0 0.0
      %598 = vmatprep.subr.mxu0 0.0
      %599 = vmatpush1.xpose.msra.mxu0 0.0
      %600 = vmatprep.subr.mxu0 0.0
      %601 = vmatpush1.xpose.msra.mxu0 0.0
      %602 = vmatprep.subr.mxu0 0.0
      %603 = vmatpush1.xpose.msra.mxu0 0.0
      %604 = vmatprep.subr.mxu0 0.0
      %605 = vmatpush1.xpose.msra.mxu0 0.0
      %606 = vmatprep.mubr.f32.mxu0 0.0
      %607 = vmatmul.mubr.f32.gmra.mrb[0].mxu0 %v510
      %v608 = vpop.f32.mrb[0].mxu0
      %v609 = vadd.f32 0.0, %v608
      %v610 = vpop.f32.mrb[0].mxu0
      %611 = vmatprep.mubr.f32.mxu0 0.0
      %612 = vmatmul.mubr.f32.gmra.mrb[0].mxu0 %v512
      %v613 = vpop.f32.mrb[0].mxu0
      %v614 = vadd.f32 0.0, %v613
      %v615 = vpop.f32.mrb[0].mxu0
      %616 = vmatprep.mubr.f32.mxu0 0.0
      %617 = vmatmul.mubr.f32.gmra.mrb[0].mxu0 %v514
      %v618 = vpop.f32.mrb[0].mxu0
      %v619 = vadd.f32 0.0, %v618
      %v620 = vpop.f32.mrb[0].mxu0
      %621 = vmatprep.mubr.f32.mxu0 0.0
      %622 = vmatmul.mubr.f32.gmra.mrb[0].mxu0 %v516
      %v623 = vpop.f32.mrb[0].mxu0
      %v624 = vadd.f32 0.0, %v623
      %v625 = vpop.f32.mrb[0].mxu0
      %626 = vmatprep.mubr.f32.mxu0 0.0
      %627 = vmatmul.mubr.f32.gmra.mrb[0].mxu0 %v518
      %v628 = vpop.f32.mrb[0].mxu0
      %v629 = vadd.f32 0.0, %v628
      %v630 = vpop.f32.mrb[0].mxu0
      %631 = vmatprep.mubr.f32.mxu0 0.0
      %632 = vmatmul.mubr.f32.gmra.mrb[0].mxu0 %v520
      %v633 = vpop.f32.mrb[0].mxu0
      %v634 = vadd.f32 0.0, %v633
      %v635 = vpop.f32.mrb[0].mxu0
      %636 = vmatprep.mubr.f32.mxu0 0.0
      %637 = vmatmul.mubr.f32.gmra.mrb[0].mxu0 %v522
      %v638 = vpop.f32.mrb[0].mxu0
      %v639 = vadd.f32 0.0, %v638
      %v640 = vpop.f32.mrb[0].mxu0
      %641 = vmatprep.mubr.f32.mxu0 0.0
      %642 = vmatmul.mubr.f32.gmra.mrb[0].mxu0 %v524
      %v643 = vpop.f32.mrb[0].mxu0
      %v644 = vadd.f32 0.0, %v643
      %v645 = vpop.f32.mrb[0].mxu0
      %646 = vdwg.mxu0
      %655 = vrot.lane.b32.xlu0 %v447, 120
      %v656 = vpop.permute.xlu0 %655
      %657 = vrot.lane.b32.xlu0 %v452, 120
      %v658 = vpop.permute.xlu0 %657
      %659 = vrot.lane.b32.xlu0 %v457, 120
      %v660 = vpop.permute.xlu0 %659
      %661 = vrot.lane.b32.xlu0 %v462, 120
      %v662 = vpop.permute.xlu0 %661
      %663 = vrot.lane.b32.xlu0 %v467, 120
      %v664 = vpop.permute.xlu0 %663
      %665 = vrot.lane.b32.xlu0 %v472, 120
      %v666 = vpop.permute.xlu0 %665
      %667 = vrot.lane.b32.xlu0 %v477, 120
      %v668 = vpop.permute.xlu0 %667
      %669 = vrot.lane.b32.xlu0 %v482, 120
      %v670 = vpop.permute.xlu0 %669
      %v671 = vsel %vm509, %v447, 0
      %v673 = vsel %vm509, %v452, 0
      %v675 = vsel %vm509, %v457, 0
      %v677 = vsel %vm509, %v462, 0
      %v679 = vsel %vm509, %v467, 0
      %v681 = vsel %vm509, %v472, 0
      %v683 = vsel %vm509, %v477, 0
      %v685 = vsel %vm509, %v482, 0
      %v687 = vsel %vm509, %v656, 0
      %v689 = vsel %vm509, %v658, 0
      %v691 = vsel %vm509, %v660, 0
      %v693 = vsel %vm509, %v662, 0
      %v695 = vsel %vm509, %v664, 0
      %v697 = vsel %vm509, %v666, 0
      %v699 = vsel %vm509, %v668, 0
      %v701 = vsel %vm509, %v670, 0
      %703 = vmatprep.subr.mxu0 0.0
      %704 = vmatpush1.xpose.msra.mxu0 %v687
      %705 = vmatprep.subr.mxu0 0.0
      %706 = vmatpush1.xpose.msra.mxu0 %v689
      %707 = vmatprep.subr.mxu0 0.0
      %708 = vmatpush1.xpose.msra.mxu0 %v691
      %709 = vmatprep.subr.mxu0 0.0
      %710 = vmatpush1.xpose.msra.mxu0 %v693
      %711 = vmatprep.subr.mxu0 0.0
      %712 = vmatpush1.xpose.msra.mxu0 %v695
      %713 = vmatprep.subr.mxu0 0.0
      %714 = vmatpush1.xpose.msra.mxu0 %v697
      %715 = vmatprep.subr.mxu0 0.0
      %716 = vmatpush1.xpose.msra.mxu0 %v699
      %717 = vmatprep.subr.mxu0 0.0
      %718 = vmatpush1.xpose.msra.mxu0 %v701
      %719 = vmatprep.subr.mxu0 0.0
      %720 = vmatpush1.xpose.msra.mxu0 0.0
      %721 = vmatprep.subr.mxu0 0.0
      %722 = vmatpush1.xpose.msra.mxu0 0.0
      %723 = vmatprep.subr.mxu0 0.0
      %724 = vmatpush1.xpose.msra.mxu0 0.0
      %725 = vmatprep.subr.mxu0 0.0
      %726 = vmatpush1.xpose.msra.mxu0 0.0
      %727 = vmatprep.subr.mxu0 0.0
      %728 = vmatpush1.xpose.msra.mxu0 0.0
      %729 = vmatprep.subr.mxu0 0.0
      %730 = vmatpush1.xpose.msra.mxu0 0.0
      %731 = vmatprep.subr.mxu0 0.0
      %732 = vmatpush1.xpose.msra.mxu0 0.0
      %733 = vmatprep.subr.mxu0 0.0
      %734 = vmatpush1.xpose.msra.mxu0 0.0
      %735 = vmatprep.subr.mxu0 0.0
      %736 = vmatpush1.xpose.msra.mxu0 0.0
      %737 = vmatprep.subr.mxu0 0.0
      %738 = vmatpush1.xpose.msra.mxu0 0.0
      %739 = vmatprep.subr.mxu0 0.0
      %740 = vmatpush1.xpose.msra.mxu0 0.0
      %741 = vmatprep.subr.mxu0 0.0
      %742 = vmatpush1.xpose.msra.mxu0 0.0
      %743 = vmatprep.subr.mxu0 0.0
      %744 = vmatpush1.xpose.msra.mxu0 0.0
      %745 = vmatprep.subr.mxu0 0.0
      %746 = vmatpush1.xpose.msra.mxu0 0.0
      %747 = vmatprep.subr.mxu0 0.0
      %748 = vmatpush1.xpose.msra.mxu0 0.0
      %749 = vmatprep.subr.mxu0 0.0
      %750 = vmatpush1.xpose.msra.mxu0 0.0
      %751 = vmatprep.subr.mxu0 0.0
      %752 = vmatpush1.xpose.msra.mxu0 0.0
      %753 = vmatprep.subr.mxu0 0.0
      %754 = vmatpush1.xpose.msra.mxu0 0.0
      %755 = vmatprep.subr.mxu0 0.0
      %756 = vmatpush1.xpose.msra.mxu0 0.0
      %757 = vmatprep.subr.mxu0 0.0
      %758 = vmatpush1.xpose.msra.mxu0 0.0
      %759 = vmatprep.subr.mxu0 0.0
      %760 = vmatpush1.xpose.msra.mxu0 0.0
      %761 = vmatprep.subr.mxu0 0.0
      %762 = vmatpush1.xpose.msra.mxu0 0.0
      %763 = vmatprep.subr.mxu0 0.0
      %764 = vmatpush1.xpose.msra.mxu0 0.0
      %765 = vmatprep.subr.mxu0 0.0
      %766 = vmatpush1.xpose.msra.mxu0 0.0
      %767 = vmatprep.mubr.f32.mxu0 0.0
      %768 = vmatmul.mubr.f32.gmra.mrb[0].mxu0 %v671
      %v769 = vpop.f32.mrb[0].mxu0
      %v770 = vadd.f32 0.0, %v769
      %v771 = vpop.f32.mrb[0].mxu0
      %772 = vmatprep.mubr.f32.mxu0 0.0
      %773 = vmatmul.mubr.f32.gmra.mrb[0].mxu0 %v673
      %v774 = vpop.f32.mrb[0].mxu0
      %v775 = vadd.f32 0.0, %v774
      %v776 = vpop.f32.mrb[0].mxu0
      %777 = vmatprep.mubr.f32.mxu0 0.0
      %778 = vmatmul.mubr.f32.gmra.mrb[0].mxu0 %v675
      %v779 = vpop.f32.mrb[0].mxu0
      %v780 = vadd.f32 0.0, %v779
      %v781 = vpop.f32.mrb[0].mxu0
      %782 = vmatprep.mubr.f32.mxu0 0.0
      %783 = vmatmul.mubr.f32.gmra.mrb[0].mxu0 %v677
      %v784 = vpop.f32.mrb[0].mxu0
      %v785 = vadd.f32 0.0, %v784
      %v786 = vpop.f32.mrb[0].mxu0
      %787 = vmatprep.mubr.f32.mxu0 0.0
      %788 = vmatmul.mubr.f32.gmra.mrb[0].mxu0 %v679
      %v789 = vpop.f32.mrb[0].mxu0
      %v790 = vadd.f32 0.0, %v789
      %v791 = vpop.f32.mrb[0].mxu0
      %792 = vmatprep.mubr.f32.mxu0 0.0
      %793 = vmatmul.mubr.f32.gmra.mrb[0].mxu0 %v681
      %v794 = vpop.f32.mrb[0].mxu0
      %v795 = vadd.f32 0.0, %v794
      %v796 = vpop.f32.mrb[0].mxu0
      %797 = vmatprep.mubr.f32.mxu0 0.0
      %798 = vmatmul.mubr.f32.gmra.mrb[0].mxu0 %v683
      %v799 = vpop.f32.mrb[0].mxu0
      %v800 = vadd.f32 0.0, %v799
      %v801 = vpop.f32.mrb[0].mxu0
      %802 = vmatprep.mubr.f32.mxu0 0.0
      %803 = vmatmul.mubr.f32.gmra.mrb[0].mxu0 %v685
      %v804 = vpop.f32.mrb[0].mxu0
      %v805 = vadd.f32 0.0, %v804
      %v806 = vpop.f32.mrb[0].mxu0
      %807 = vdwg.mxu0
      %vm808 = vcmask 523264
      %v809 = vsel %vm808, %v609, -inf
      %810 = vmax.xlane.f32.xlu0 %v809
      %v811 = vpop.xlane.xlu0 %810
      %v812 = vsel %vm808, %v614, -inf
      %813 = vmax.xlane.f32.xlu0 %v812
      %v814 = vpop.xlane.xlu0 %813
      %v815 = vsel %vm808, %v619, -inf
      %816 = vmax.xlane.f32.xlu0 %v815
      %v817 = vpop.xlane.xlu0 %816
      %v818 = vsel %vm808, %v624, -inf
      %819 = vmax.xlane.f32.xlu0 %v818
      %v820 = vpop.xlane.xlu0 %819
      %v821 = vsel %vm808, %v629, -inf
      %822 = vmax.xlane.f32.xlu0 %v821
      %v823 = vpop.xlane.xlu0 %822
      %v824 = vsel %vm808, %v634, -inf
      %825 = vmax.xlane.f32.xlu0 %v824
      %v826 = vpop.xlane.xlu0 %825
      %v827 = vsel %vm808, %v639, -inf
      %828 = vmax.xlane.f32.xlu0 %v827
      %v829 = vpop.xlane.xlu0 %828
      %v830 = vsel %vm808, %v644, -inf
      %831 = vmax.xlane.f32.xlu0 %v830
      %v832 = vpop.xlane.xlu0 %831
      %v833 = vsel %vm808, %v770, -inf
      %834 = vmax.xlane.f32.xlu0 %v833
      %v835 = vpop.xlane.xlu0 %834
      %v836 = vsel %vm808, %v775, -inf
      %837 = vmax.xlane.f32.xlu0 %v836
      %v838 = vpop.xlane.xlu0 %837
      %v839 = vsel %vm808, %v780, -inf
      %840 = vmax.xlane.f32.xlu0 %v839
      %v841 = vpop.xlane.xlu0 %840
      %v842 = vsel %vm808, %v785, -inf
      %843 = vmax.xlane.f32.xlu0 %v842
      %v844 = vpop.xlane.xlu0 %843
      %v845 = vsel %vm808, %v790, -inf
      %846 = vmax.xlane.f32.xlu0 %v845
      %v847 = vpop.xlane.xlu0 %846
      %v848 = vsel %vm808, %v795, -inf
      %849 = vmax.xlane.f32.xlu0 %v848
      %v850 = vpop.xlane.xlu0 %849
      %v851 = vsel %vm808, %v800, -inf
      %852 = vmax.xlane.f32.xlu0 %v851
      %v853 = vpop.xlane.xlu0 %852
      %v854 = vsel %vm808, %v805, -inf
      %855 = vmax.xlane.f32.xlu0 %v854
      %v856 = vpop.xlane.xlu0 %855
      %v857 = vsub.f32 %v609, %v811
      %v858 = vsub.f32 %v614, %v814
      %v859 = vsub.f32 %v619, %v817
      %v860 = vsub.f32 %v624, %v820
      %v861 = vsub.f32 %v629, %v823
      %v862 = vsub.f32 %v634, %v826
      %v863 = vsub.f32 %v639, %v829
      %v864 = vsub.f32 %v644, %v832
      %v865 = vsub.f32 %v770, %v835
      %v866 = vsub.f32 %v775, %v838
      %v867 = vsub.f32 %v780, %v841
      %v868 = vsub.f32 %v785, %v844
      %v869 = vsub.f32 %v790, %v847
      %v870 = vsub.f32 %v795, %v850
      %v871 = vsub.f32 %v800, %v853
      %v872 = vsub.f32 %v805, %v856
      %v873 = vmul.f32 %v857, 1.442695
      %v874 = vpow.pop %v873
      %v875 = vmul.f32 %v858, 1.442695
      %v876 = vpow.pop %v875
      %v877 = vmul.f32 %v859, 1.442695
      %v878 = vpow.pop %v877
      %v879 = vmul.f32 %v860, 1.442695
      %v880 = vpow.pop %v879
      %v881 = vmul.f32 %v861, 1.442695
      %v882 = vpow.pop %v881
      %v883 = vmul.f32 %v862, 1.442695
      %v884 = vpow.pop %v883
      %v885 = vmul.f32 %v863, 1.442695
      %v886 = vpow.pop %v885
      %v887 = vmul.f32 %v864, 1.442695
      %v888 = vpow.pop %v887
      %v889 = vmul.f32 %v865, 1.442695
      %v890 = vpow.pop %v889
      %v891 = vmul.f32 %v866, 1.442695
      %v892 = vpow.pop %v891
      %v893 = vmul.f32 %v867, 1.442695
      %v894 = vpow.pop %v893
      %v895 = vmul.f32 %v868, 1.442695
      %v896 = vpow.pop %v895
      %v897 = vmul.f32 %v869, 1.442695
      %v898 = vpow.pop %v897
      %v899 = vmul.f32 %v870, 1.442695
      %v900 = vpow.pop %v899
      %v901 = vmul.f32 %v871, 1.442695
      %v902 = vpow.pop %v901
      %v903 = vmul.f32 %v872, 1.442695
      %v904 = vpow.pop %v903
      %v905 = vsel %vm808, %v874, 0.0
      %906 = vadd.xlane.f32.xlu0 %v905
      %v907 = vpop.xlane.xlu0 %906
      %v908 = vsel %vm808, %v876, 0.0
      %909 = vadd.xlane.f32.xlu0 %v908
      %v910 = vpop.xlane.xlu0 %909
      %v911 = vsel %vm808, %v878, 0.0
      %912 = vadd.xlane.f32.xlu0 %v911
      %v913 = vpop.xlane.xlu0 %912
      %v914 = vsel %vm808, %v880, 0.0
      %915 = vadd.xlane.f32.xlu0 %v914
      %v916 = vpop.xlane.xlu0 %915
      %v917 = vsel %vm808, %v882, 0.0
      %918 = vadd.xlane.f32.xlu0 %v917
      %v919 = vpop.xlane.xlu0 %918
      %v920 = vsel %vm808, %v884, 0.0
      %921 = vadd.xlane.f32.xlu0 %v920
      %v922 = vpop.xlane.xlu0 %921
      %v923 = vsel %vm808, %v886, 0.0
      %924 = vadd.xlane.f32.xlu0 %v923
      %v925 = vpop.xlane.xlu0 %924
      %v926 = vsel %vm808, %v888, 0.0
      %927 = vadd.xlane.f32.xlu0 %v926
      %v928 = vpop.xlane.xlu0 %927
      %v929 = vsel %vm808, %v890, 0.0
      %930 = vadd.xlane.f32.xlu0 %v929
      %v931 = vpop.xlane.xlu0 %930
      %v932 = vsel %vm808, %v892, 0.0
      %933 = vadd.xlane.f32.xlu0 %v932
      %v934 = vpop.xlane.xlu0 %933
      %v935 = vsel %vm808, %v894, 0.0
      %936 = vadd.xlane.f32.xlu0 %v935
      %v937 = vpop.xlane.xlu0 %936
      %v938 = vsel %vm808, %v896, 0.0
      %939 = vadd.xlane.f32.xlu0 %v938
      %v940 = vpop.xlane.xlu0 %939
      %v941 = vsel %vm808, %v898, 0.0
      %942 = vadd.xlane.f32.xlu0 %v941
      %v943 = vpop.xlane.xlu0 %942
      %v944 = vsel %vm808, %v900, 0.0
      %945 = vadd.xlane.f32.xlu0 %v944
      %v946 = vpop.xlane.xlu0 %945
      %v947 = vsel %vm808, %v902, 0.0
      %948 = vadd.xlane.f32.xlu0 %v947
      %v949 = vpop.xlane.xlu0 %948
      %v950 = vsel %vm808, %v904, 0.0
      %951 = vadd.xlane.f32.xlu0 %v950
      %v952 = vpop.xlane.xlu0 %951
      %953 = vrot.lane.b32.xlu0 %v407, 112
      %v954 = vpop.permute.xlu0 %953
      %955 = vrot.lane.b32.xlu0 %v412, 112
      %v956 = vpop.permute.xlu0 %955
      %957 = vrot.lane.b32.xlu0 %v417, 112
      %v958 = vpop.permute.xlu0 %957
      %959 = vrot.lane.b32.xlu0 %v422, 112
      %v960 = vpop.permute.xlu0 %959
      %961 = vrot.lane.b32.xlu0 %v427, 112
      %v962 = vpop.permute.xlu0 %961
      %963 = vrot.lane.b32.xlu0 %v432, 112
      %v964 = vpop.permute.xlu0 %963
      %965 = vrot.lane.b32.xlu0 %v437, 112
      %v966 = vpop.permute.xlu0 %965
      %967 = vrot.lane.b32.xlu0 %v442, 112
      %v968 = vpop.permute.xlu0 %967
      %v978 = vsel %vm808, %v874, 0
      %v981 = vsel %vm808, %v876, 0
      %v984 = vsel %vm808, %v878, 0
      %v987 = vsel %vm808, %v880, 0
      %v990 = vsel %vm808, %v882, 0
      %v993 = vsel %vm808, %v884, 0
      %v996 = vsel %vm808, %v886, 0
      %v999 = vsel %vm808, %v888, 0
      %1001 = vmatprep.subr.mxu0 0.0
      %1002 = vmatpush1.msra.mxu0 %v954
      %1003 = vmatprep.subr.mxu0 0.0
      %1004 = vmatpush1.msra.mxu0 %v956
      %1005 = vmatprep.subr.mxu0 0.0
      %1006 = vmatpush1.msra.mxu0 %v958
      %1007 = vmatprep.subr.mxu0 0.0
      %1008 = vmatpush1.msra.mxu0 %v960
      %1009 = vmatprep.subr.mxu0 0.0
      %1010 = vmatpush1.msra.mxu0 %v962
      %1011 = vmatprep.subr.mxu0 0.0
      %1012 = vmatpush1.msra.mxu0 %v964
      %1013 = vmatprep.subr.mxu0 0.0
      %1014 = vmatpush1.msra.mxu0 %v966
      %1015 = vmatprep.subr.mxu0 0.0
      %1016 = vmatpush1.msra.mxu0 %v968
      %1017 = vmatprep.subr.mxu0 0.0
      %1018 = vmatpush1.msra.mxu0 0.0
      %1019 = vmatprep.subr.mxu0 0.0
      %1020 = vmatpush1.msra.mxu0 0.0
      %1021 = vmatprep.subr.mxu0 0.0
      %1022 = vmatpush1.msra.mxu0 0.0
      %1023 = vmatprep.subr.mxu0 0.0
      %1024 = vmatpush1.msra.mxu0 0.0
      %1025 = vmatprep.subr.mxu0 0.0
      %1026 = vmatpush1.msra.mxu0 0.0
      %1027 = vmatprep.subr.mxu0 0.0
      %1028 = vmatpush1.msra.mxu0 0.0
      %1029 = vmatprep.subr.mxu0 0.0
      %1030 = vmatpush1.msra.mxu0 0.0
      %1031 = vmatprep.subr.mxu0 0.0
      %1032 = vmatpush1.msra.mxu0 0.0
      %1033 = vmatprep.subr.mxu0 0.0
      %1034 = vmatpush1.msra.mxu0 0.0
      %1035 = vmatprep.subr.mxu0 0.0
      %1036 = vmatpush1.msra.mxu0 0.0
      %1037 = vmatprep.subr.mxu0 0.0
      %1038 = vmatpush1.msra.mxu0 0.0
      %1039 = vmatprep.subr.mxu0 0.0
      %1040 = vmatpush1.msra.mxu0 0.0
      %1041 = vmatprep.subr.mxu0 0.0
      %1042 = vmatpush1.msra.mxu0 0.0
      %1043 = vmatprep.subr.mxu0 0.0
      %1044 = vmatpush1.msra.mxu0 0.0
      %1045 = vmatprep.subr.mxu0 0.0
      %1046 = vmatpush1.msra.mxu0 0.0
      %1047 = vmatprep.subr.mxu0 0.0
      %1048 = vmatpush1.msra.mxu0 0.0
      %1049 = vmatprep.subr.mxu0 0.0
      %1050 = vmatpush1.msra.mxu0 0.0
      %1051 = vmatprep.subr.mxu0 0.0
      %1052 = vmatpush1.msra.mxu0 0.0
      %1053 = vmatprep.subr.mxu0 0.0
      %1054 = vmatpush1.msra.mxu0 0.0
      %1055 = vmatprep.subr.mxu0 0.0
      %1056 = vmatpush1.msra.mxu0 0.0
      %1057 = vmatprep.subr.mxu0 0.0
      %1058 = vmatpush1.msra.mxu0 0.0
      %1059 = vmatprep.subr.mxu0 0.0
      %1060 = vmatpush1.msra.mxu0 0.0
      %1061 = vmatprep.subr.mxu0 0.0
      %1062 = vmatpush1.msra.mxu0 0.0
      %1063 = vmatprep.subr.mxu0 0.0
      %1064 = vmatpush1.msra.mxu0 0.0
      %1065 = vmatprep.mubr.f32.mxu0 0.0
      %1066 = vmatmul.mubr.f32.gmra.mrb[0].mxu0 %v978
      %v1067 = vpop.f32.mrb[0].mxu0
      %v1068 = vadd.f32 0.0, %v1067
      %v1069 = vpop.f32.mrb[0].mxu0
      %1070 = vmatprep.mubr.f32.mxu0 0.0
      %1071 = vmatmul.mubr.f32.gmra.mrb[0].mxu0 %v981
      %v1072 = vpop.f32.mrb[0].mxu0
      %v1073 = vadd.f32 0.0, %v1072
      %v1074 = vpop.f32.mrb[0].mxu0
      %1075 = vmatprep.mubr.f32.mxu0 0.0
      %1076 = vmatmul.mubr.f32.gmra.mrb[0].mxu0 %v984
      %v1077 = vpop.f32.mrb[0].mxu0
      %v1078 = vadd.f32 0.0, %v1077
      %v1079 = vpop.f32.mrb[0].mxu0
      %1080 = vmatprep.mubr.f32.mxu0 0.0
      %1081 = vmatmul.mubr.f32.gmra.mrb[0].mxu0 %v987
      %v1082 = vpop.f32.mrb[0].mxu0
      %v1083 = vadd.f32 0.0, %v1082
      %v1084 = vpop.f32.mrb[0].mxu0
      %1085 = vmatprep.mubr.f32.mxu0 0.0
      %1086 = vmatmul.mubr.f32.gmra.mrb[0].mxu0 %v990
      %v1087 = vpop.f32.mrb[0].mxu0
      %v1088 = vadd.f32 0.0, %v1087
      %v1089 = vpop.f32.mrb[0].mxu0
      %1090 = vmatprep.mubr.f32.mxu0 0.0
      %1091 = vmatmul.mubr.f32.gmra.mrb[0].mxu0 %v993
      %v1092 = vpop.f32.mrb[0].mxu0
      %v1093 = vadd.f32 0.0, %v1092
      %v1094 = vpop.f32.mrb[0].mxu0
      %1095 = vmatprep.mubr.f32.mxu0 0.0
      %1096 = vmatmul.mubr.f32.gmra.mrb[0].mxu0 %v996
      %v1097 = vpop.f32.mrb[0].mxu0
      %v1098 = vadd.f32 0.0, %v1097
      %v1099 = vpop.f32.mrb[0].mxu0
      %1100 = vmatprep.mubr.f32.mxu0 0.0
      %1101 = vmatmul.mubr.f32.gmra.mrb[0].mxu0 %v999
      %v1102 = vpop.f32.mrb[0].mxu0
      %v1103 = vadd.f32 0.0, %v1102
      %v1104 = vpop.f32.mrb[0].mxu0
      %1105 = vdwg.mxu0
      %1106 = vrot.lane.b32.xlu0 %v447, 112
      %v1107 = vpop.permute.xlu0 %1106
      %1108 = vrot.lane.b32.xlu0 %v452, 112
      %v1109 = vpop.permute.xlu0 %1108
      %1110 = vrot.lane.b32.xlu0 %v457, 112
      %v1111 = vpop.permute.xlu0 %1110
      %1112 = vrot.lane.b32.xlu0 %v462, 112
      %v1113 = vpop.permute.xlu0 %1112
      %1114 = vrot.lane.b32.xlu0 %v467, 112
      %v1115 = vpop.permute.xlu0 %1114
      %1116 = vrot.lane.b32.xlu0 %v472, 112
      %v1117 = vpop.permute.xlu0 %1116
      %1118 = vrot.lane.b32.xlu0 %v477, 112
      %v1119 = vpop.permute.xlu0 %1118
      %1120 = vrot.lane.b32.xlu0 %v482, 112
      %v1121 = vpop.permute.xlu0 %1120
      %v1131 = vsel %vm808, %v890, 0
      %v1134 = vsel %vm808, %v892, 0
      %v1137 = vsel %vm808, %v894, 0
      %v1140 = vsel %vm808, %v896, 0
      %v1143 = vsel %vm808, %v898, 0
      %v1146 = vsel %vm808, %v900, 0
      %v1149 = vsel %vm808, %v902, 0
      %v1152 = vsel %vm808, %v904, 0
      %1154 = vmatprep.subr.mxu0 0.0
      %1155 = vmatpush1.msra.mxu0 %v1107
      %1156 = vmatprep.subr.mxu0 0.0
      %1157 = vmatpush1.msra.mxu0 %v1109
      %1158 = vmatprep.subr.mxu0 0.0
      %1159 = vmatpush1.msra.mxu0 %v1111
      %1160 = vmatprep.subr.mxu0 0.0
      %1161 = vmatpush1.msra.mxu0 %v1113
      %1162 = vmatprep.subr.mxu0 0.0
      %1163 = vmatpush1.msra.mxu0 %v1115
      %1164 = vmatprep.subr.mxu0 0.0
      %1165 = vmatpush1.msra.mxu0 %v1117
      %1166 = vmatprep.subr.mxu0 0.0
      %1167 = vmatpush1.msra.mxu0 %v1119
      %1168 = vmatprep.subr.mxu0 0.0
      %1169 = vmatpush1.msra.mxu0 %v1121
      %1170 = vmatprep.subr.mxu0 0.0
      %1171 = vmatpush1.msra.mxu0 0.0
      %1172 = vmatprep.subr.mxu0 0.0
      %1173 = vmatpush1.msra.mxu0 0.0
      %1174 = vmatprep.subr.mxu0 0.0
      %1175 = vmatpush1.msra.mxu0 0.0
      %1176 = vmatprep.subr.mxu0 0.0
      %1177 = vmatpush1.msra.mxu0 0.0
      %1178 = vmatprep.subr.mxu0 0.0
      %1179 = vmatpush1.msra.mxu0 0.0
      %1180 = vmatprep.subr.mxu0 0.0
      %1181 = vmatpush1.msra.mxu0 0.0
      %1182 = vmatprep.subr.mxu0 0.0
      %1183 = vmatpush1.msra.mxu0 0.0
      %1184 = vmatprep.subr.mxu0 0.0
      %1185 = vmatpush1.msra.mxu0 0.0
      %1186 = vmatprep.subr.mxu0 0.0
      %1187 = vmatpush1.msra.mxu0 0.0
      %1188 = vmatprep.subr.mxu0 0.0
      %1189 = vmatpush1.msra.mxu0 0.0
      %1190 = vmatprep.subr.mxu0 0.0
      %1191 = vmatpush1.msra.mxu0 0.0
      %1192 = vmatprep.subr.mxu0 0.0
      %1193 = vmatpush1.msra.mxu0 0.0
      %1194 = vmatprep.subr.mxu0 0.0
      %1195 = vmatpush1.msra.mxu0 0.0
      %1196 = vmatprep.subr.mxu0 0.0
      %1197 = vmatpush1.msra.mxu0 0.0
      %1198 = vmatprep.subr.mxu0 0.0
      %1199 = vmatpush1.msra.mxu0 0.0
      %1200 = vmatprep.subr.mxu0 0.0
      %1201 = vmatpush1.msra.mxu0 0.0
      %1202 = vmatprep.subr.mxu0 0.0
      %1203 = vmatpush1.msra.mxu0 0.0
      %1204 = vmatprep.subr.mxu0 0.0
      %1205 = vmatpush1.msra.mxu0 0.0
      %1206 = vmatprep.subr.mxu0 0.0
      %1207 = vmatpush1.msra.mxu0 0.0
      %1208 = vmatprep.subr.mxu0 0.0
      %1209 = vmatpush1.msra.mxu0 0.0
      %1210 = vmatprep.subr.mxu0 0.0
      %1211 = vmatpush1.msra.mxu0 0.0
      %1212 = vmatprep.subr.mxu0 0.0
      %1213 = vmatpush1.msra.mxu0 0.0
      %1214 = vmatprep.subr.mxu0 0.0
      %1215 = vmatpush1.msra.mxu0 0.0
      %1216 = vmatprep.subr.mxu0 0.0
      %1217 = vmatpush1.msra.mxu0 0.0
      %1218 = vmatprep.mubr.f32.mxu0 0.0
      %1219 = vmatmul.mubr.f32.gmra.mrb[0].mxu0 %v1131
      %v1220 = vpop.f32.mrb[0].mxu0
      %v1221 = vadd.f32 0.0, %v1220
      %v1222 = vpop.f32.mrb[0].mxu0
      %1223 = vmatprep.mubr.f32.mxu0 0.0
      %1224 = vmatmul.mubr.f32.gmra.mrb[0].mxu0 %v1134
      %v1225 = vpop.f32.mrb[0].mxu0
      %v1226 = vadd.f32 0.0, %v1225
      %v1227 = vpop.f32.mrb[0].mxu0
      %1228 = vmatprep.mubr.f32.mxu0 0.0
      %1229 = vmatmul.mubr.f32.gmra.mrb[0].mxu0 %v1137
      %v1230 = vpop.f32.mrb[0].mxu0
      %v1231 = vadd.f32 0.0, %v1230
      %v1232 = vpop.f32.mrb[0].mxu0
      %1233 = vmatprep.mubr.f32.mxu0 0.0
      %1234 = vmatmul.mubr.f32.gmra.mrb[0].mxu0 %v1140
      %v1235 = vpop.f32.mrb[0].mxu0
      %v1236 = vadd.f32 0.0, %v1235
      %v1237 = vpop.f32.mrb[0].mxu0
      %1238 = vmatprep.mubr.f32.mxu0 0.0
      %1239 = vmatmul.mubr.f32.gmra.mrb[0].mxu0 %v1143
      %v1240 = vpop.f32.mrb[0].mxu0
      %v1241 = vadd.f32 0.0, %v1240
      %v1242 = vpop.f32.mrb[0].mxu0
      %1243 = vmatprep.mubr.f32.mxu0 0.0
      %1244 = vmatmul.mubr.f32.gmra.mrb[0].mxu0 %v1146
      %v1245 = vpop.f32.mrb[0].mxu0
      %v1246 = vadd.f32 0.0, %v1245
      %v1247 = vpop.f32.mrb[0].mxu0
      %1248 = vmatprep.mubr.f32.mxu0 0.0
      %1249 = vmatmul.mubr.f32.gmra.mrb[0].mxu0 %v1149
      %v1250 = vpop.f32.mrb[0].mxu0
      %v1251 = vadd.f32 0.0, %v1250
      %v1252 = vpop.f32.mrb[0].mxu0
      %1253 = vmatprep.mubr.f32.mxu0 0.0
      %1254 = vmatmul.mubr.f32.gmra.mrb[0].mxu0 %v1152
      %v1255 = vpop.f32.mrb[0].mxu0
      %v1256 = vadd.f32 0.0, %v1255
      %v1257 = vpop.f32.mrb[0].mxu0
      %1258 = vdwg.mxu0
      %v1259 = vrcp.pop %v907
      %v1260 = vrcp.pop %v910
      %v1261 = vrcp.pop %v913
      %v1262 = vrcp.pop %v916
      %v1263 = vrcp.pop %v919
      %v1264 = vrcp.pop %v922
      %v1265 = vrcp.pop %v925
      %v1266 = vrcp.pop %v928
      %v1267 = vrcp.pop %v931
      %v1268 = vrcp.pop %v934
      %v1269 = vrcp.pop %v937
      %v1270 = vrcp.pop %v940
      %v1271 = vrcp.pop %v943
      %v1272 = vrcp.pop %v946
      %v1273 = vrcp.pop %v949
      %v1274 = vrcp.pop %v952
      %v1275 = vmul.f32 %v1068, %v1259
      %v1276 = vmul.f32 %v1073, %v1260
      %v1277 = vmul.f32 %v1078, %v1261
      %v1278 = vmul.f32 %v1083, %v1262
      %v1279 = vmul.f32 %v1088, %v1263
      %v1280 = vmul.f32 %v1093, %v1264
      %v1281 = vmul.f32 %v1098, %v1265
      %v1282 = vmul.f32 %v1103, %v1266
      %v1283 = vmul.f32 %v1221, %v1267
      %v1284 = vmul.f32 %v1226, %v1268
      %v1285 = vmul.f32 %v1231, %v1269
      %v1286 = vmul.f32 %v1236, %v1270
      %v1287 = vmul.f32 %v1241, %v1271
      %v1288 = vmul.f32 %v1246, %v1272
      %v1289 = vmul.f32 %v1251, %v1273
      %v1290 = vmul.f32 %v1256, %v1274
      %v1291 = vld [vmem:[#allocation2] sm:$0xff]
      %v1292 = vld [vmem:[#allocation2 + $0x8] sm:$0xff]
      %v1293 = vld [vmem:[#allocation2 + $0x10] sm:$0xff]
      %v1294 = vld [vmem:[#allocation2 + $0x18] sm:$0xff]
      %v1295 = vld [vmem:[#allocation2 + $0x20] sm:$0xff]
      %v1296 = vld [vmem:[#allocation2 + $0x28] sm:$0xff]
      %v1297 = vld [vmem:[#allocation2 + $0x30] sm:$0xff]
      %v1298 = vld [vmem:[#allocation2 + $0x38] sm:$0xff]
      %v1299 = vld [vmem:[#allocation2 + $0x40] sm:$0xff]
      %v1300 = vld [vmem:[#allocation2 + $0x48] sm:$0xff]
      %v1301 = vld [vmem:[#allocation2 + $0x50] sm:$0xff]
      %v1302 = vld [vmem:[#allocation2 + $0x58] sm:$0xff]
      %v1303 = vld [vmem:[#allocation2 + $0x60] sm:$0xff]
      %v1304 = vld [vmem:[#allocation2 + $0x68] sm:$0xff]
      %v1305 = vld [vmem:[#allocation2 + $0x70] sm:$0xff]
      %v1306 = vld [vmem:[#allocation2 + $0x78] sm:$0xff]
      %v1307 = vld [vmem:[%s243] sm:$0xff]
      %v1309 = vsel %vm509, %v1275, 0
      %v1312 = vsel %vm509, %v1276, 0
      %v1315 = vsel %vm509, %v1277, 0
      %v1318 = vsel %vm509, %v1278, 0
      %v1321 = vsel %vm509, %v1279, 0
      %v1324 = vsel %vm509, %v1280, 0
      %v1327 = vsel %vm509, %v1281, 0
      %v1330 = vsel %vm509, %v1282, 0
      %v1333 = vsel %vm509, %v1283, 0
      %v1336 = vsel %vm509, %v1284, 0
      %v1339 = vsel %vm509, %v1285, 0
      %v1342 = vsel %vm509, %v1286, 0
      %v1345 = vsel %vm509, %v1287, 0
      %v1348 = vsel %vm509, %v1288, 0
      %v1351 = vsel %vm509, %v1289, 0
      %v1354 = vsel %vm509, %v1290, 0
      %1356 = vmatprep.subr.mxu0 0.0
      %1357 = vmatpush1.msra.mxu0 %v1307
      %1358 = vmatprep.subr.mxu0 0.0
      %1359 = vmatpush1.msra.mxu0 0.0
      %1360 = vmatprep.subr.mxu0 0.0
      %1361 = vmatpush1.msra.mxu0 0.0
      %1362 = vmatprep.subr.mxu0 0.0
      %1363 = vmatpush1.msra.mxu0 0.0
      %1364 = vmatprep.subr.mxu0 0.0
      %1365 = vmatpush1.msra.mxu0 0.0
      %1366 = vmatprep.subr.mxu0 0.0
      %1367 = vmatpush1.msra.mxu0 0.0
      %1368 = vmatprep.subr.mxu0 0.0
      %1369 = vmatpush1.msra.mxu0 0.0
      %1370 = vmatprep.subr.mxu0 0.0
      %1371 = vmatpush1.msra.mxu0 0.0
      %1372 = vmatprep.subr.mxu0 0.0
      %1373 = vmatpush1.msra.mxu0 0.0
      %1374 = vmatprep.subr.mxu0 0.0
      %1375 = vmatpush1.msra.mxu0 0.0
      %1376 = vmatprep.subr.mxu0 0.0
      %1377 = vmatpush1.msra.mxu0 0.0
      %1378 = vmatprep.subr.mxu0 0.0
      %1379 = vmatpush1.msra.mxu0 0.0
      %1380 = vmatprep.subr.mxu0 0.0
      %1381 = vmatpush1.msra.mxu0 0.0
      %1382 = vmatprep.subr.mxu0 0.0
      %1383 = vmatpush1.msra.mxu0 0.0
      %1384 = vmatprep.subr.mxu0 0.0
      %1385 = vmatpush1.msra.mxu0 0.0
      %1386 = vmatprep.subr.mxu0 0.0
      %1387 = vmatpush1.msra.mxu0 0.0
      %1388 = vmatprep.subr.mxu0 0.0
      %1389 = vmatpush1.msra.mxu0 0.0
      %1390 = vmatprep.subr.mxu0 0.0
      %1391 = vmatpush1.msra.mxu0 0.0
      %1392 = vmatprep.subr.mxu0 0.0
      %1393 = vmatpush1.msra.mxu0 0.0
      %1394 = vmatprep.subr.mxu0 0.0
      %1395 = vmatpush1.msra.mxu0 0.0
      %1396 = vmatprep.subr.mxu0 0.0
      %1397 = vmatpush1.msra.mxu0 0.0
      %1398 = vmatprep.subr.mxu0 0.0
      %1399 = vmatpush1.msra.mxu0 0.0
      %1400 = vmatprep.subr.mxu0 0.0
      %1401 = vmatpush1.msra.mxu0 0.0
      %1402 = vmatprep.subr.mxu0 0.0
      %1403 = vmatpush1.msra.mxu0 0.0
      %1404 = vmatprep.subr.mxu0 0.0
      %1405 = vmatpush1.msra.mxu0 0.0
      %1406 = vmatprep.subr.mxu0 0.0
      %1407 = vmatpush1.msra.mxu0 0.0
      %1408 = vmatprep.subr.mxu0 0.0
      %1409 = vmatpush1.msra.mxu0 0.0
      %1410 = vmatprep.subr.mxu0 0.0
      %1411 = vmatpush1.msra.mxu0 0.0
      %1412 = vmatprep.subr.mxu0 0.0
      %1413 = vmatpush1.msra.mxu0 0.0
      %1414 = vmatprep.subr.mxu0 0.0
      %1415 = vmatpush1.msra.mxu0 0.0
      %1416 = vmatprep.subr.mxu0 0.0
      %1417 = vmatpush1.msra.mxu0 0.0
      %1418 = vmatprep.subr.mxu0 0.0
      %1419 = vmatpush1.msra.mxu0 0.0
      %1420 = vmatprep.mubr.f32.mxu0 0.0
      %1421 = vmatmul.mubr.f32.gmra.mrb[0].mxu0 %v1309
      %v1422 = vpop.f32.mrb[0].mxu0
      %v1423 = vadd.f32 0.0, %v1422
      %v1424 = vpop.f32.mrb[0].mxu0
      %1425 = vmatprep.mubr.f32.mxu0 0.0
      %1426 = vmatmul.mubr.f32.gmra.mrb[0].mxu0 %v1312
      %v1427 = vpop.f32.mrb[0].mxu0
      %v1428 = vadd.f32 0.0, %v1427
      %v1429 = vpop.f32.mrb[0].mxu0
      %1430 = vmatprep.mubr.f32.mxu0 0.0
      %1431 = vmatmul.mubr.f32.gmra.mrb[0].mxu0 %v1315
      %v1432 = vpop.f32.mrb[0].mxu0
      %v1433 = vadd.f32 0.0, %v1432
      %v1434 = vpop.f32.mrb[0].mxu0
      %1435 = vmatprep.mubr.f32.mxu0 0.0
      %1436 = vmatmul.mubr.f32.gmra.mrb[0].mxu0 %v1318
      %v1437 = vpop.f32.mrb[0].mxu0
      %v1438 = vadd.f32 0.0, %v1437
      %v1439 = vpop.f32.mrb[0].mxu0
      %1440 = vmatprep.mubr.f32.mxu0 0.0
      %1441 = vmatmul.mubr.f32.gmra.mrb[0].mxu0 %v1321
      %v1442 = vpop.f32.mrb[0].mxu0
      %v1443 = vadd.f32 0.0, %v1442
      %v1444 = vpop.f32.mrb[0].mxu0
      %1445 = vmatprep.mubr.f32.mxu0 0.0
      %1446 = vmatmul.mubr.f32.gmra.mrb[0].mxu0 %v1324
      %v1447 = vpop.f32.mrb[0].mxu0
      %v1448 = vadd.f32 0.0, %v1447
      %v1449 = vpop.f32.mrb[0].mxu0
      %1450 = vmatprep.mubr.f32.mxu0 0.0
      %1451 = vmatmul.mubr.f32.gmra.mrb[0].mxu0 %v1327
      %v1452 = vpop.f32.mrb[0].mxu0
      %v1453 = vadd.f32 0.0, %v1452
      %v1454 = vpop.f32.mrb[0].mxu0
      %1455 = vmatprep.mubr.f32.mxu0 0.0
      %1456 = vmatmul.mubr.f32.gmra.mrb[0].mxu0 %v1330
      %v1457 = vpop.f32.mrb[0].mxu0
      %v1458 = vadd.f32 0.0, %v1457
      %v1459 = vpop.f32.mrb[0].mxu0
      %1460 = vmatprep.mubr.f32.mxu0 0.0
      %1461 = vmatmul.mubr.f32.gmra.mrb[0].mxu0 %v1333
      %v1462 = vpop.f32.mrb[0].mxu0
      %v1463 = vadd.f32 0.0, %v1462
      %v1464 = vpop.f32.mrb[0].mxu0
      %1465 = vmatprep.mubr.f32.mxu0 0.0
      %1466 = vmatmul.mubr.f32.gmra.mrb[0].mxu0 %v1336
      %v1467 = vpop.f32.mrb[0].mxu0
      %v1468 = vadd.f32 0.0, %v1467
      %v1469 = vpop.f32.mrb[0].mxu0
      %1470 = vmatprep.mubr.f32.mxu0 0.0
      %1471 = vmatmul.mubr.f32.gmra.mrb[0].mxu0 %v1339
      %v1472 = vpop.f32.mrb[0].mxu0
      %v1473 = vadd.f32 0.0, %v1472
      %v1474 = vpop.f32.mrb[0].mxu0
      %1475 = vmatprep.mubr.f32.mxu0 0.0
      %1476 = vmatmul.mubr.f32.gmra.mrb[0].mxu0 %v1342
      %v1477 = vpop.f32.mrb[0].mxu0
      %v1478 = vadd.f32 0.0, %v1477
      %v1479 = vpop.f32.mrb[0].mxu0
      %1480 = vmatprep.mubr.f32.mxu0 0.0
      %1481 = vmatmul.mubr.f32.gmra.mrb[0].mxu0 %v1345
      %v1482 = vpop.f32.mrb[0].mxu0
      %v1483 = vadd.f32 0.0, %v1482
      %v1484 = vpop.f32.mrb[0].mxu0
      %1485 = vmatprep.mubr.f32.mxu0 0.0
      %1486 = vmatmul.mubr.f32.gmra.mrb[0].mxu0 %v1348
      %v1487 = vpop.f32.mrb[0].mxu0
      %v1488 = vadd.f32 0.0, %v1487
      %v1489 = vpop.f32.mrb[0].mxu0
      %1490 = vmatprep.mubr.f32.mxu0 0.0
      %1491 = vmatmul.mubr.f32.gmra.mrb[0].mxu0 %v1351
      %v1492 = vpop.f32.mrb[0].mxu0
      %v1493 = vadd.f32 0.0, %v1492
      %v1494 = vpop.f32.mrb[0].mxu0
      %1495 = vmatprep.mubr.f32.mxu0 0.0
      %1496 = vmatmul.mubr.f32.gmra.mrb[0].mxu0 %v1354
      %v1497 = vpop.f32.mrb[0].mxu0
      %v1498 = vadd.f32 0.0, %v1497
      %v1499 = vpop.f32.mrb[0].mxu0
      %1500 = vdwg.mxu0
      %v1501 = vadd.f32 %v1291, %v1423
      %v1502 = vadd.f32 %v1292, %v1428
      %v1503 = vadd.f32 %v1293, %v1433
      %v1504 = vadd.f32 %v1294, %v1438
      %v1505 = vadd.f32 %v1295, %v1443
      %v1506 = vadd.f32 %v1296, %v1448
      %v1507 = vadd.f32 %v1297, %v1453
      %v1508 = vadd.f32 %v1298, %v1458
      %v1509 = vadd.f32 %v1299, %v1463
      %v1510 = vadd.f32 %v1300, %v1468
      %v1511 = vadd.f32 %v1301, %v1473
      %v1512 = vadd.f32 %v1302, %v1478
      %v1513 = vadd.f32 %v1303, %v1483
      %v1514 = vadd.f32 %v1304, %v1488
      %v1515 = vadd.f32 %v1305, %v1493
      %v1516 = vadd.f32 %v1306, %v1498
      %1517 = vst.msk [vmem:[#allocation2] sm:$0xff] %vm291, %v1501
      %1518 = vst.msk [vmem:[#allocation2 + $0x8] sm:$0xff] %vm291, %v1502
      %1519 = vst.msk [vmem:[#allocation2 + $0x10] sm:$0xff] %vm291, %v1503
      %1520 = vst.msk [vmem:[#allocation2 + $0x18] sm:$0xff] %vm291, %v1504
      %1521 = vst.msk [vmem:[#allocation2 + $0x20] sm:$0xff] %vm291, %v1505
      %1522 = vst.msk [vmem:[#allocation2 + $0x28] sm:$0xff] %vm291, %v1506
      %1523 = vst.msk [vmem:[#allocation2 + $0x30] sm:$0xff] %vm291, %v1507
      %1524 = vst.msk [vmem:[#allocation2 + $0x38] sm:$0xff] %vm291, %v1508
      %1525 = vst.msk [vmem:[#allocation2 + $0x40] sm:$0xff] %vm291, %v1509
      %1526 = vst.msk [vmem:[#allocation2 + $0x48] sm:$0xff] %vm291, %v1510
      %1527 = vst.msk [vmem:[#allocation2 + $0x50] sm:$0xff] %vm291, %v1511
      %1528 = vst.msk [vmem:[#allocation2 + $0x58] sm:$0xff] %vm291, %v1512
      %1529 = vst.msk [vmem:[#allocation2 + $0x60] sm:$0xff] %vm291, %v1513
      %1530 = vst.msk [vmem:[#allocation2 + $0x68] sm:$0xff] %vm291, %v1514
      %1531 = vst.msk [vmem:[#allocation2 + $0x70] sm:$0xff] %vm291, %v1515
      %1532 = vst.msk [vmem:[#allocation2 + $0x78] sm:$0xff] %vm291, %v1516
      %p1533 = scmp.eq.s32.totalorder %s20, 3
      // Predicated region
      $region41: #{tpu_custom_call.1} parent=35 // pred_check
        %p1534 = pneg %p1533
      $region42: #{tpu_custom_call.1} parent=35 // pred_check_branch
        %1536 = sbr.rel (%p1534) target = $region44
      $region43: #{tpu_custom_call.1} parent=35 // pred_region
        %v1537 = vld [vmem:[#allocation2] sm:$0xff]
        %v1538 = vld [vmem:[#allocation2 + $0x8] sm:$0xff]
        %v1539 = vld [vmem:[#allocation2 + $0x10] sm:$0xff]
        %v1540 = vld [vmem:[#allocation2 + $0x18] sm:$0xff]
        %v1541 = vld [vmem:[#allocation2 + $0x20] sm:$0xff]
        %v1542 = vld [vmem:[#allocation2 + $0x28] sm:$0xff]
        %v1543 = vld [vmem:[#allocation2 + $0x30] sm:$0xff]
        %v1544 = vld [vmem:[#allocation2 + $0x38] sm:$0xff]
        %v1545 = vld [vmem:[#allocation2 + $0x40] sm:$0xff]
        %v1546 = vld [vmem:[#allocation2 + $0x48] sm:$0xff]
        %v1547 = vld [vmem:[#allocation2 + $0x50] sm:$0xff]
        %v1548 = vld [vmem:[#allocation2 + $0x58] sm:$0xff]
        %v1549 = vld [vmem:[#allocation2 + $0x60] sm:$0xff]
        %v1550 = vld [vmem:[#allocation2 + $0x68] sm:$0xff]
        %v1551 = vld [vmem:[#allocation2 + $0x70] sm:$0xff]
        %v1552 = vld [vmem:[#allocation2 + $0x78] sm:$0xff]
        %v1553 = vld [vmem:[%s3] sm:$0x1]
        %v1555 = vlaneseq
        %v1556 = vshrl.u32 %v1555, 7
        %v1557 = vsub.s32 0, %v1556
        %v1558 = vrot.slane %v1553, %v1557
        %v1560 = vadd.f32 %v1537, %v1558
        %v1561 = vadd.f32 %v1538, %v1558
        %v1562 = vadd.f32 %v1539, %v1558
        %v1563 = vadd.f32 %v1540, %v1558
        %v1564 = vadd.f32 %v1541, %v1558
        %v1565 = vadd.f32 %v1542, %v1558
        %v1566 = vadd.f32 %v1543, %v1558
        %v1567 = vadd.f32 %v1544, %v1558
        %v1568 = vadd.f32 %v1545, %v1558
        %v1569 = vadd.f32 %v1546, %v1558
        %v1570 = vadd.f32 %v1547, %v1558
        %v1571 = vadd.f32 %v1548, %v1558
        %v1572 = vadd.f32 %v1549, %v1558
        %v1573 = vadd.f32 %v1550, %v1558
        %v1574 = vadd.f32 %v1551, %v1558
        %v1575 = vadd.f32 %v1552, %v1558
        %1576 = vst.msk [vmem:[%s248] sm:$0xff] %vm291, %v1560
        %1577 = vst.msk [vmem:[%s248 + $0x8] sm:$0xff] %vm291, %v1561
        %1578 = vst.msk [vmem:[%s248 + $0x10] sm:$0xff] %vm291, %v1562
        %1579 = vst.msk [vmem:[%s248 + $0x18] sm:$0xff] %vm291, %v1563
        %1580 = vst.msk [vmem:[%s248 + $0x20] sm:$0xff] %vm291, %v1564
        %1581 = vst.msk [vmem:[%s248 + $0x28] sm:$0xff] %vm291, %v1565
        %1582 = vst.msk [vmem:[%s248 + $0x30] sm:$0xff] %vm291, %v1566
        %1583 = vst.msk [vmem:[%s248 + $0x38] sm:$0xff] %vm291, %v1567
        %1584 = vst.msk [vmem:[%s248 + $0x40] sm:$0xff] %vm291, %v1568
        %1585 = vst.msk [vmem:[%s248 + $0x48] sm:$0xff] %vm291, %v1569
        %1586 = vst.msk [vmem:[%s248 + $0x50] sm:$0xff] %vm291, %v1570
        %1587 = vst.msk [vmem:[%s248 + $0x58] sm:$0xff] %vm291, %v1571
        %1588 = vst.msk [vmem:[%s248 + $0x60] sm:$0xff] %vm291, %v1572
        %1589 = vst.msk [vmem:[%s248 + $0x68] sm:$0xff] %vm291, %v1573
        %1590 = vst.msk [vmem:[%s248 + $0x70] sm:$0xff] %vm291, %v1574
        %1591 = vst.msk [vmem:[%s248 + $0x78] sm:$0xff] %vm291, %v1575
      $region44: #{tpu_custom_call.1} parent=35 // pred_fallthru
        _
      %s1592 = smul.u32 16, %s19
      %p1593 = scmp.lt.s32.totalorder %s1592, 15
      %s1594 = scalar_select %p1593, %s1592, 15
      %s1595 = smul.addr %s1594, 8
      %s1596 = scalar_lea.vmem %s4, %s1595
      // Predicated region
      $region45: #{tpu_custom_call.1} parent=35 // pred_check
        %p1597 = pneg %p144
      $region46: #{tpu_custom_call.1} parent=35 // pred_check_branch
        %1599 = sbr.rel (%p1597) target = $region48
      $region47: #{tpu_custom_call.1} parent=35 // pred_region
        %s1600 = smul.u32 16, %s19
      $region48: #{tpu_custom_call.1} parent=35 // pred_fallthru
        _
      // Predicated region
      $region49: #{tpu_custom_call.1} parent=35 // pred_check
        %p1601 = pneg %p144
      $region50: #{tpu_custom_call.1} parent=35 // pred_check_branch
        %1603 = sbr.rel (%p1601) target = $region52
      $region51: #{tpu_custom_call.1} parent=35 // pred_region
        %s1604 = smul.u32 16, %s19
        %p1605 = scmp.lt.s32.totalorder %s1604, 15
        %s1606 = scalar_select %p1605, %s1604, 15
        %s1607 = smul.addr %s1606, 8
        %s1608 = scalar_lea.vmem %s4, %s1607
      $region52: #{tpu_custom_call.1} parent=35 // pred_fallthru
        _
    $region36: #{tpu_custom_call.1} parent=5 // pred_fallthru
      _
    %p1609 = scmp.le.s32.totalorder 2, %s10
    // Predicated region
    $region53: #{tpu_custom_call.1} parent=5 // pred_check
      %p1610 = pneg %p1609
    $region54: #{tpu_custom_call.1} parent=5 // pred_check_branch
      %1612 = sbr.rel (%p1610) target = $region56
    $region55: #{tpu_custom_call.1} parent=5 // pred_region
      %s1613 = ssub.s32 %s10, 2
    $region56: #{tpu_custom_call.1} parent=5 // pred_fallthru
      _
  $region6: #{tpu_custom_call.1} parent=0 // loop_footer
    %s14 = sadd.s32 1, %s10
  $region7: #{tpu_custom_call.1} parent=0 // loop_footer_branch
    %9 = sbr.rel target = $region3
  $region8: #{tpu_custom_call.1} parent=0 // loop_exit
    _

</llo_original>
